<compile_context>
chip_gen: v7x
topology: tpu7x:2x2x1
jax: 0.10.0
libtpu: 0.0.40
codegen_flags: <defaults>
</compile_context>

<pallas_src>
import math
import jax
import jax.numpy as jnp
from jax.experimental import pallas as pl
from jax.experimental.pallas import tpu as pltpu

# ----------------------------- synthetic config -----------------------------
VOCAB = 100
TYPE_VOCAB = 2
MAX_POS = 32
HIDDEN = 32          # bert.config.hidden_size
N_LAYERS = 2
INTERMEDIATE = 64
MIDDLE_HIDDEN = 16   # config.middle_hidden_size
LN_EPS = 1e-12

# lane-padded widths (TPU lane width = 128); padded regions are zero-filled.
H_PAD = 128
I_PAD = 128
OUT_PAD = 128

# ---- packed-slab column layout (static, 128-aligned offsets) ----
# bf16 weight slab: [H_PAD, W_TOTAL]
W_QKV = 0                                # [H_PAD, 3*H_PAD]  (Wq pre-scaled by 1/sqrt(HIDDEN))
W_WO = 3 * H_PAD                         # [H_PAD, H_PAD]
W_W1 = W_WO + H_PAD                      # [H_PAD, I_PAD]
W_W2 = W_W1 + I_PAD                      # [I_PAD, H_PAD]
W_PER_LAYER = W_W2 + H_PAD               # 768
W_POOL = N_LAYERS * W_PER_LAYER          # [H_PAD, H_PAD]
W_TRANS = W_POOL + H_PAD                 # [H_PAD, OUT_PAD]
W_TOTAL = W_TRANS + OUT_PAD              # 1792

# f32 bias / LayerNorm slab: [1, B_TOTAL]
B_QKV = 0                                # [1, 3*H_PAD]  (bq pre-scaled by 1/sqrt(HIDDEN))
B_BO = 3 * H_PAD
B_LN1G = B_BO + H_PAD
B_LN1B = B_LN1G + H_PAD
B_B1 = B_LN1B + H_PAD
B_B2 = B_B1 + I_PAD
B_LN2G = B_B2 + H_PAD
B_LN2B = B_LN2G + H_PAD
B_PER_LAYER = B_LN2B + H_PAD             # 1280
B_EMBG = N_LAYERS * B_PER_LAYER
B_EMBB = B_EMBG + H_PAD
B_POOL = B_EMBB + H_PAD
B_TRANS = B_POOL + H_PAD
B_TOTAL = B_TRANS + OUT_PAD              # 3072

_VMEM = pl.BlockSpec(memory_space=pltpu.MemorySpace.VMEM)


# ------------------------------- fused Pallas kernel ------------------------------
def text_model_kernel(emb_ref, abias_ref, w_ref, b_ref, o_ref):
    """emb_ref   : [B*S, H_PAD] f32   embeddings (padded lanes zero)
       abias_ref : [B*S, B*S]  f32   block-diagonal additive attention bias (0 / -1e9)
       w_ref     : [H_PAD, W_TOTAL] bf16  packed matmul weights
       b_ref     : [1, B_TOTAL]     f32   packed biases / LayerNorm params
       o_ref     : [B*S, OUT_PAD]   f32   ReLU(head) output slab (dense store)"""
    f32, bf16 = jnp.float32, jnp.bfloat16

    # LayerNorm over the TRUE hidden width: padded lanes are masked out of the statistics and
    # forced to zero on the output (gamma/beta are zero-padded).
    lane = jax.lax.broadcasted_iota(jnp.int32, (1, H_PAD), 1)
    h_mask = (lane < HIDDEN).astype(f32)
    inv_h = 1.0 / HIDDEN

    def layernorm(x, g, b):
        mu = jnp.sum(x, axis=-1, keepdims=True) * inv_h          # padded lanes are zero
        d = (x - mu) * h_mask
        var = jnp.sum(d * d, axis=-1, keepdims=True) * inv_h
        return d * jax.lax.rsqrt(var + LN_EPS) * g + b

    def mm(a, w):   # bf16 MXU inputs, f32 accumulation
        return jnp.dot(a.astype(bf16), w.astype(bf16), preferred_element_type=f32)

    def bias(off, width=H_PAD):
        return b_ref[:, off:off + width]

    # embedding LayerNorm ([B*S, H_PAD], padded lanes zero)
    x = layernorm(emb_ref[...], bias(B_EMBG), bias(B_EMBB))
    attn_bias = abias_ref[...]                                   # [B*S, B*S]

    for l in range(N_LAYERS):
        wb = l * W_PER_LAYER
        bb = l * B_PER_LAYER

        # packed QKV projection: one [B*S, H_PAD] x [H_PAD, 3*H_PAD] matmul
        # (Wq / bq carry the 1/sqrt(HIDDEN) attention scale from pack time)
        qkv = mm(x, w_ref[:, wb + W_QKV:wb + W_QKV + 3 * H_PAD]) + bias(bb + B_QKV, 3 * H_PAD)
        q = qkv[:, 0:H_PAD]
        k = qkv[:, H_PAD:2 * H_PAD]
        v = qkv[:, 2 * H_PAD:3 * H_PAD]

        # block-diagonal attention over all B*S rows at once (single-head, num_heads=1)
        s = jax.lax.dot_general(q.astype(bf16), k.astype(bf16),
                                (((1,), (1,)), ((), ())),
                                preferred_element_type=f32)      # [B*S, B*S]
        s = s + attn_bias                                        # cross-batch / padded keys -> -1e9
        s = s - jnp.max(s, axis=-1, keepdims=True)
        p = jnp.exp(s)
        p = p * pl.reciprocal(jnp.sum(p, axis=-1, keepdims=True), approx=True)
        ctx = mm(p, v)                                           # [B*S, H_PAD]

        # TODO(synk): BERT's internal attention/hidden dropouts are identity in eval mode.
        attn = mm(ctx, w_ref[:, wb + W_WO:wb + W_WO + H_PAD]) + bias(bb + B_BO)
        h = layernorm(x + attn, bias(bb + B_LN1G), bias(bb + B_LN1B))

        ff = mm(h, w_ref[:, wb + W_W1:wb + W_W1 + I_PAD]) + bias(bb + B_B1, I_PAD)
        # TODO(synk): HF BERT default 'gelu' is erf-exact; tanh approximation used here.
        ff = jax.nn.gelu(ff, approximate=True)
        ff = mm(ff, w_ref[:, wb + W_W2:wb + W_W2 + H_PAD]) + bias(bb + B_B2)
        x = layernorm(h + ff, bias(bb + B_LN2G), bias(bb + B_LN2B))

    # pooler + head on ALL rows (same number of MXU passes as CLS-only; dense stores).
    pooled = jnp.tanh(mm(x, w_ref[:, W_POOL:W_POOL + H_PAD]) + bias(B_POOL))
    # TextModel head: Dropout (identity in eval) -> Linear -> ReLU, lane-padded to OUT_PAD.
    y = mm(pooled, w_ref[:, W_TRANS:W_TRANS + OUT_PAD]) + bias(B_TRANS, OUT_PAD)
    o_ref[...] = jnp.maximum(y, 0.0)


# --------------------------------- parameters ---------------------------------
def init_params(key):
    keys = jax.random.split(key, 8 + N_LAYERS)

    def normal(k, shape, scale=0.02):
        return (scale * jax.random.normal(k, shape)).astype(jnp.float32)

    params = {
        'word_emb': normal(keys[0], (VOCAB, HIDDEN)),
        'pos_emb': normal(keys[1], (MAX_POS, HIDDEN)),
        'type_emb': normal(keys[2], (TYPE_VOCAB, HIDDEN)),
        'emb_ln_g': jnp.ones((1, HIDDEN), jnp.float32),
        'emb_ln_b': jnp.zeros((1, HIDDEN), jnp.float32),
        'pool_w': normal(keys[3], (HIDDEN, HIDDEN)),
        'pool_b': jnp.zeros((1, HIDDEN), jnp.float32),
        'trans_w': normal(keys[4], (HIDDEN, MIDDLE_HIDDEN)),
        'trans_b': jnp.zeros((1, MIDDLE_HIDDEN), jnp.float32),
        'layers': [],
    }
    for l in range(N_LAYERS):
        lk = jax.random.split(keys[5 + l], 6)
        params['layers'].append({
            'wq': normal(lk[0], (HIDDEN, HIDDEN)), 'bq': jnp.zeros((1, HIDDEN), jnp.float32),
            'wk': normal(lk[1], (HIDDEN, HIDDEN)), 'bk': jnp.zeros((1, HIDDEN), jnp.float32),
            'wv': normal(lk[2], (HIDDEN, HIDDEN)), 'bv': jnp.zeros((1, HIDDEN), jnp.float32),
            'wo': normal(lk[3], (HIDDEN, HIDDEN)), 'bo': jnp.zeros((1, HIDDEN), jnp.float32),
            'ln1_g': jnp.ones((1, HIDDEN), jnp.float32),
            'ln1_b': jnp.zeros((1, HIDDEN), jnp.float32),
            'w1': normal(lk[4], (HIDDEN, INTERMEDIATE)),
            'b1': jnp.zeros((1, INTERMEDIATE), jnp.float32),
            'w2': normal(lk[5], (INTERMEDIATE, HIDDEN)),
            'b2': jnp.zeros((1, HIDDEN), jnp.float32),
            'ln2_g': jnp.ones((1, HIDDEN), jnp.float32),
            'ln2_b': jnp.zeros((1, HIDDEN), jnp.float32),
        })
    return params


def _pad2(a, rows, cols):
    """Zero-pad a 2-D f32 array to (rows, cols)."""
    return jnp.zeros((rows, cols), jnp.float32).at[:a.shape[0], :a.shape[1]].set(
        a.astype(jnp.float32))


def pack_params(params):
    """One-time packing: zero-pad every matrix to 128-lane widths, fold the attention scale
    into Wq/bq, and concatenate everything into ONE bf16 weight slab + ONE f32 bias/LN slab."""
    L = params['layers']
    scale = 1.0 / math.sqrt(HIDDEN)            # single-head attention scale, folded into Wq/bq

    w_parts, b_parts = [], []
    for l in L:
        w_parts += [
            _pad2(l['wq'] * scale, H_PAD, H_PAD),
            _pad2(l['wk'], H_PAD, H_PAD),
            _pad2(l['wv'], H_PAD, H_PAD),
            _pad2(l['wo'], H_PAD, H_PAD),
            _pad2(l['w1'], H_PAD, I_PAD),
            _pad2(l['w2'], I_PAD, H_PAD),
        ]
        b_parts += [
            _pad2(l['bq'] * scale, 1, H_PAD),
            _pad2(l['bk'], 1, H_PAD),
            _pad2(l['bv'], 1, H_PAD),
            _pad2(l['bo'], 1, H_PAD),
            _pad2(l['ln1_g'], 1, H_PAD),
            _pad2(l['ln1_b'], 1, H_PAD),
            _pad2(l['b1'], 1, I_PAD),
            _pad2(l['b2'], 1, H_PAD),
            _pad2(l['ln2_g'], 1, H_PAD),
            _pad2(l['ln2_b'], 1, H_PAD),
        ]
    w_parts += [_pad2(params['pool_w'], H_PAD, H_PAD),
                _pad2(params['trans_w'], H_PAD, OUT_PAD)]
    b_parts += [_pad2(params['emb_ln_g'], 1, H_PAD),
                _pad2(params['emb_ln_b'], 1, H_PAD),
                _pad2(params['pool_b'], 1, H_PAD),
                _pad2(params['trans_b'], 1, OUT_PAD)]

    w_slab = jnp.concatenate(w_parts, axis=1).astype(jnp.bfloat16)   # [H_PAD, W_TOTAL] bf16
    b_slab = jnp.concatenate(b_parts, axis=1)                        # [1, B_TOTAL]     f32
    assert w_slab.shape == (H_PAD, W_TOTAL) and b_slab.shape == (1, B_TOTAL)

    # Padded-lane correctness depends on LayerNorm gamma/beta (and biases) being zero-padded.
    ln_offsets = [B_EMBG, B_EMBB]
    for l in range(N_LAYERS):
        bb = l * B_PER_LAYER
        ln_offsets += [bb + B_LN1G, bb + B_LN1B, bb + B_LN2G, bb + B_LN2B]
    for off in ln_offsets:
        assert bool(jnp.all(b_slab[0, off + HIDDEN:off + H_PAD] == 0.0)), \
            'LayerNorm params must be zero in padded lanes'

    return {
        'word_emb': _pad2(params['word_emb'], VOCAB, H_PAD),     # lane-padded embedding tables:
        'pos_emb': _pad2(params['pos_emb'], MAX_POS, H_PAD),     # gathers directly yield [.,128]
        'type_emb': _pad2(params['type_emb'], TYPE_VOCAB, H_PAD),
        'w_slab': w_slab,
        'b_slab': b_slab,
    }


# --------------------------------- forward pass --------------------------------
@jax.jit
def text_model_forward(packed, bert_inputs, masks, token_type_ids=None):
    assert bert_inputs.shape == masks.shape, \
        'error! bert_inputs and masks must have same shape!'
    B, S = bert_inputs.shape
    M = B * S
    if token_type_ids is None:
        token_type_ids = jnp.zeros_like(bert_inputs)

    # Embedding gathers (glue); tables are pre-padded to 128 lanes so this is already [B, S, 128].
    pos_ids = jnp.arange(S, dtype=jnp.int32)
    emb = (jnp.take(packed['word_emb'], bert_inputs, axis=0)
           + jnp.take(packed['pos_emb'], pos_ids, axis=0)[None, :, :]
           + jnp.take(packed['type_emb'], token_type_ids, axis=0))
    emb_flat = emb.reshape(M, H_PAD).astype(jnp.float32)

    # Block-diagonal additive attention bias: 0 for (same batch element AND valid key), else -1e9.
    rows = jnp.arange(M, dtype=jnp.int32)
    same_batch = (rows[:, None] // S) == (rows[None, :] // S)
    key_valid = (masks.reshape(M) != 0)[None, :]
    attn_bias = jnp.where(same_batch & key_valid, 0.0, -1e9).astype(jnp.float32)   # [M, M]

    y = pl.pallas_call(
        text_model_kernel,
        out_shape=jax.ShapeDtypeStruct((M, OUT_PAD), jnp.float32),   # dense output slab
        in_specs=[_VMEM] * 4,
        out_specs=_VMEM,
    )(emb_flat, attn_bias, packed['w_slab'], packed['b_slab'])

    # CLS rows (0, S, 2S, ...) and the true head width.
    return y[::S, :MIDDLE_HIDDEN]                                    # [B, MIDDLE_HIDDEN]


if __name__ == "__main__":
    B, S = 2, 8
    key = jax.random.PRNGKey(0)
    k_ids, k_params = jax.random.split(key)

    bert_inputs = jax.random.randint(k_ids, (B, S), 0, VOCAB, dtype=jnp.int32)
    masks = jnp.ones((B, S), dtype=jnp.int32).at[1, 6:].set(0)   # pad last 2 tokens of row 1
    params = init_params(k_params)
    packed = pack_params(params)

    out = text_model_forward(packed, bert_inputs, masks, token_type_ids=None)
    out = jax.block_until_ready(out)

    assert out.shape == (B, MIDDLE_HIDDEN)
    assert bool(jnp.all(out >= 0.0)) and bool(jnp.all(jnp.isfinite(out)))  # ReLU output
    print("KERNEL_OK")
</pallas_src>

<mosaic_0001>
module attributes {stable_mosaic.version = 11 : i64} {
  func.func @text_model_kernel(%arg0: memref<16x128xf32, #tpu.memory_space<vmem>>, %arg1: memref<16x16xf32, #tpu.memory_space<vmem>>, %arg2: memref<128x1792xbf16, #tpu.memory_space<vmem>>, %arg3: memref<1x3072xf32, #tpu.memory_space<vmem>>, %arg4: memref<16x128xf32, #tpu.memory_space<vmem>>) attributes {dimension_semantics = [], scalar_prefetch = 0 : i64, scratch_operands = 0 : i64, tpu.core_type = #tpu.core_type<tc>} {
    %0 = tpu.iota {dimensions = array<i32: 1>} : vector<1x128xi32>
    %c32_i32 = arith.constant 32 : i32
    %1 = vector.broadcast %c32_i32 : i32 to vector<1x128xi32>
    %2 = arith.cmpi slt, %0, %1 : vector<1x128xi32>
    %3 = arith.extui %2 : vector<1x128xi1> to vector<1x128xi32>
    %4 = arith.sitofp %3 : vector<1x128xi32> to vector<1x128xf32>
    %c0 = arith.constant 0 : index
    %c0_0 = arith.constant 0 : index
    %5 = vector.load %arg0[%c0, %c0_0] : memref<16x128xf32, #tpu.memory_space<vmem>>, vector<16x128xf32>
    %c0_1 = arith.constant 0 : index
    %c2560 = arith.constant 2560 : index
    %6 = vector.load %arg3[%c0_1, %c2560] : memref<1x3072xf32, #tpu.memory_space<vmem>>, vector<1x128xf32>
    %c0_2 = arith.constant 0 : index
    %c2688 = arith.constant 2688 : index
    %7 = vector.load %arg3[%c0_2, %c2688] : memref<1x3072xf32, #tpu.memory_space<vmem>>, vector<1x128xf32>
    %cst = arith.constant dense<0.000000e+00> : vector<16xf32>
    %8 = vector.multi_reduction <add>, %5, %cst [1] : vector<16x128xf32> to vector<16xf32>
    %9 = vector.shape_cast %8 : vector<16xf32> to vector<16x1xf32>
    %cst_3 = arith.constant 3.125000e-02 : f32
    %10 = vector.broadcast %cst_3 : f32 to vector<16x1xf32>
    %11 = arith.mulf %9, %10 : vector<16x1xf32>
    %12 = vector.broadcast %11 : vector<16x1xf32> to vector<16x128xf32>
    %13 = arith.subf %5, %12 : vector<16x128xf32>
    %14 = vector.broadcast %4 : vector<1x128xf32> to vector<16x128xf32>
    %15 = arith.mulf %13, %14 : vector<16x128xf32>
    %16 = arith.mulf %15, %15 : vector<16x128xf32>
    %cst_4 = arith.constant dense<0.000000e+00> : vector<16xf32>
    %17 = vector.multi_reduction <add>, %16, %cst_4 [1] : vector<16x128xf32> to vector<16xf32>
    %18 = vector.shape_cast %17 : vector<16xf32> to vector<16x1xf32>
    %cst_5 = arith.constant 3.125000e-02 : f32
    %19 = vector.broadcast %cst_5 : f32 to vector<16x1xf32>
    %20 = arith.mulf %18, %19 : vector<16x1xf32>
    %cst_6 = arith.constant 9.99999996E-13 : f32
    %21 = vector.broadcast %cst_6 : f32 to vector<16x1xf32>
    %22 = arith.addf %20, %21 : vector<16x1xf32>
    %23 = math.rsqrt %22 : vector<16x1xf32>
    %24 = vector.broadcast %23 : vector<16x1xf32> to vector<16x128xf32>
    %25 = arith.mulf %15, %24 : vector<16x128xf32>
    %26 = vector.broadcast %6 : vector<1x128xf32> to vector<16x128xf32>
    %27 = arith.mulf %25, %26 : vector<16x128xf32>
    %28 = vector.broadcast %7 : vector<1x128xf32> to vector<16x128xf32>
    %29 = arith.addf %27, %28 : vector<16x128xf32>
    %c0_7 = arith.constant 0 : index
    %c0_8 = arith.constant 0 : index
    %30 = vector.load %arg1[%c0_7, %c0_8] : memref<16x16xf32, #tpu.memory_space<vmem>>, vector<16x16xf32>
    %c0_9 = arith.constant 0 : index
    %c0_10 = arith.constant 0 : index
    %31 = vector.load %arg2[%c0_9, %c0_10] : memref<128x1792xbf16, #tpu.memory_space<vmem>>, vector<128x384xbf16>
    %32 = arith.truncf %29 : vector<16x128xf32> to vector<16x128xbf16>
    %cst_11 = arith.constant dense<0.000000e+00> : vector<16x384xf32>
    %33 = tpu.matmul %32, %31, %cst_11 {dimension_numbers = #tpu.dot_dimension_numbers<[1], [0], [0], [1], [0, 0, 1, 1], [], []>} : vector<16x128xbf16>, vector<128x384xbf16>, vector<16x384xf32> -> vector<16x384xf32>
    %c0_12 = arith.constant 0 : index
    %c0_13 = arith.constant 0 : index
    %34 = vector.load %arg3[%c0_12, %c0_13] : memref<1x3072xf32, #tpu.memory_space<vmem>>, vector<1x384xf32>
    %35 = vector.broadcast %34 : vector<1x384xf32> to vector<16x384xf32>
    %36 = arith.addf %33, %35 : vector<16x384xf32>
    %37 = vector.extract_strided_slice %36 {offsets = [0, 0], sizes = [16, 128], strides = [1, 1]} : vector<16x384xf32> to vector<16x128xf32>
    %38 = vector.extract_strided_slice %36 {offsets = [0, 128], sizes = [16, 128], strides = [1, 1]} : vector<16x384xf32> to vector<16x128xf32>
    %39 = vector.extract_strided_slice %36 {offsets = [0, 256], sizes = [16, 128], strides = [1, 1]} : vector<16x384xf32> to vector<16x128xf32>
    %40 = arith.truncf %37 : vector<16x128xf32> to vector<16x128xbf16>
    %41 = arith.truncf %38 : vector<16x128xf32> to vector<16x128xbf16>
    %cst_14 = arith.constant dense<0.000000e+00> : vector<16x16xf32>
    %42 = tpu.matmul %40, %41, %cst_14 {dimension_numbers = #tpu.dot_dimension_numbers<[1], [1], [0], [0], [0, 0, 1, 0], [], []>} : vector<16x128xbf16>, vector<16x128xbf16>, vector<16x16xf32> -> vector<16x16xf32>
    %43 = arith.addf %42, %30 : vector<16x16xf32>
    %cst_15 = arith.constant dense<0xFF800000> : vector<16xf32>
    %44 = vector.multi_reduction <maximumf>, %43, %cst_15 [1] : vector<16x16xf32> to vector<16xf32>
    %45 = vector.shape_cast %44 : vector<16xf32> to vector<16x1xf32>
    %46 = vector.broadcast %45 : vector<16x1xf32> to vector<16x16xf32>
    %47 = arith.subf %43, %46 : vector<16x16xf32>
    %48 = math.exp %47 : vector<16x16xf32>
    %cst_16 = arith.constant dense<0.000000e+00> : vector<16xf32>
    %49 = vector.multi_reduction <add>, %48, %cst_16 [1] : vector<16x16xf32> to vector<16xf32>
    %50 = vector.shape_cast %49 : vector<16xf32> to vector<16x1xf32>
    %51 = tpu.reciprocal %50 {approx = true} : vector<16x1xf32> -> vector<16x1xf32>
    %52 = vector.broadcast %51 : vector<16x1xf32> to vector<16x16xf32>
    %53 = arith.mulf %48, %52 : vector<16x16xf32>
    %54 = arith.truncf %53 : vector<16x16xf32> to vector<16x16xbf16>
    %55 = arith.truncf %39 : vector<16x128xf32> to vector<16x128xbf16>
    %cst_17 = arith.constant dense<0.000000e+00> : vector<16x128xf32>
    %56 = tpu.matmul %54, %55, %cst_17 {dimension_numbers = #tpu.dot_dimension_numbers<[1], [0], [0], [1], [0, 0, 1, 1], [], []>} : vector<16x16xbf16>, vector<16x128xbf16>, vector<16x128xf32> -> vector<16x128xf32>
    %c0_18 = arith.constant 0 : index
    %c384 = arith.constant 384 : index
    %57 = vector.load %arg2[%c0_18, %c384] : memref<128x1792xbf16, #tpu.memory_space<vmem>>, vector<128x128xbf16>
    %58 = arith.truncf %56 : vector<16x128xf32> to vector<16x128xbf16>
    %cst_19 = arith.constant dense<0.000000e+00> : vector<16x128xf32>
    %59 = tpu.matmul %58, %57, %cst_19 {dimension_numbers = #tpu.dot_dimension_numbers<[1], [0], [0], [1], [0, 0, 1, 1], [], []>} : vector<16x128xbf16>, vector<128x128xbf16>, vector<16x128xf32> -> vector<16x128xf32>
    %c0_20 = arith.constant 0 : index
    %c384_21 = arith.constant 384 : index
    %60 = vector.load %arg3[%c0_20, %c384_21] : memref<1x3072xf32, #tpu.memory_space<vmem>>, vector<1x128xf32>
    %61 = vector.broadcast %60 : vector<1x128xf32> to vector<16x128xf32>
    %62 = arith.addf %59, %61 : vector<16x128xf32>
    %63 = arith.addf %29, %62 : vector<16x128xf32>
    %c0_22 = arith.constant 0 : index
    %c512 = arith.constant 512 : index
    %64 = vector.load %arg3[%c0_22, %c512] : memref<1x3072xf32, #tpu.memory_space<vmem>>, vector<1x128xf32>
    %c0_23 = arith.constant 0 : index
    %c640 = arith.constant 640 : index
    %65 = vector.load %arg3[%c0_23, %c640] : memref<1x3072xf32, #tpu.memory_space<vmem>>, vector<1x128xf32>
    %cst_24 = arith.constant dense<0.000000e+00> : vector<16xf32>
    %66 = vector.multi_reduction <add>, %63, %cst_24 [1] : vector<16x128xf32> to vector<16xf32>
    %67 = vector.shape_cast %66 : vector<16xf32> to vector<16x1xf32>
    %cst_25 = arith.constant 3.125000e-02 : f32
    %68 = vector.broadcast %cst_25 : f32 to vector<16x1xf32>
    %69 = arith.mulf %67, %68 : vector<16x1xf32>
    %70 = vector.broadcast %69 : vector<16x1xf32> to vector<16x128xf32>
    %71 = arith.subf %63, %70 : vector<16x128xf32>
    %72 = vector.broadcast %4 : vector<1x128xf32> to vector<16x128xf32>
    %73 = arith.mulf %71, %72 : vector<16x128xf32>
    %74 = arith.mulf %73, %73 : vector<16x128xf32>
    %cst_26 = arith.constant dense<0.000000e+00> : vector<16xf32>
    %75 = vector.multi_reduction <add>, %74, %cst_26 [1] : vector<16x128xf32> to vector<16xf32>
    %76 = vector.shape_cast %75 : vector<16xf32> to vector<16x1xf32>
    %cst_27 = arith.constant 3.125000e-02 : f32
    %77 = vector.broadcast %cst_27 : f32 to vector<16x1xf32>
    %78 = arith.mulf %76, %77 : vector<16x1xf32>
    %cst_28 = arith.constant 9.99999996E-13 : f32
    %79 = vector.broadcast %cst_28 : f32 to vector<16x1xf32>
    %80 = arith.addf %78, %79 : vector<16x1xf32>
    %81 = math.rsqrt %80 : vector<16x1xf32>
    %82 = vector.broadcast %81 : vector<16x1xf32> to vector<16x128xf32>
    %83 = arith.mulf %73, %82 : vector<16x128xf32>
    %84 = vector.broadcast %64 : vector<1x128xf32> to vector<16x128xf32>
    %85 = arith.mulf %83, %84 : vector<16x128xf32>
    %86 = vector.broadcast %65 : vector<1x128xf32> to vector<16x128xf32>
    %87 = arith.addf %85, %86 : vector<16x128xf32>
    %c0_29 = arith.constant 0 : index
    %c512_30 = arith.constant 512 : index
    %88 = vector.load %arg2[%c0_29, %c512_30] : memref<128x1792xbf16, #tpu.memory_space<vmem>>, vector<128x128xbf16>
    %89 = arith.truncf %87 : vector<16x128xf32> to vector<16x128xbf16>
    %cst_31 = arith.constant dense<0.000000e+00> : vector<16x128xf32>
    %90 = tpu.matmul %89, %88, %cst_31 {dimension_numbers = #tpu.dot_dimension_numbers<[1], [0], [0], [1], [0, 0, 1, 1], [], []>} : vector<16x128xbf16>, vector<128x128xbf16>, vector<16x128xf32> -> vector<16x128xf32>
    %c0_32 = arith.constant 0 : index
    %c768 = arith.constant 768 : index
    %91 = vector.load %arg3[%c0_32, %c768] : memref<1x3072xf32, #tpu.memory_space<vmem>>, vector<1x128xf32>
    %92 = vector.broadcast %91 : vector<1x128xf32> to vector<16x128xf32>
    %93 = arith.addf %90, %92 : vector<16x128xf32>
    %94 = arith.mulf %93, %93 : vector<16x128xf32>
    %95 = arith.mulf %93, %94 : vector<16x128xf32>
    %cst_33 = arith.constant 4.471500e-02 : f32
    %96 = vector.broadcast %cst_33 : f32 to vector<16x128xf32>
    %97 = arith.mulf %96, %95 : vector<16x128xf32>
    %98 = arith.addf %93, %97 : vector<16x128xf32>
    %cst_34 = arith.constant 0.797884583 : f32
    %99 = vector.broadcast %cst_34 : f32 to vector<16x128xf32>
    %100 = arith.mulf %99, %98 : vector<16x128xf32>
    %101 = math.tanh %100 : vector<16x128xf32>
    %cst_35 = arith.constant 1.000000e+00 : f32
    %102 = vector.broadcast %cst_35 : f32 to vector<16x128xf32>
    %103 = arith.addf %102, %101 : vector<16x128xf32>
    %cst_36 = arith.constant 5.000000e-01 : f32
    %104 = vector.broadcast %cst_36 : f32 to vector<16x128xf32>
    %105 = arith.mulf %104, %103 : vector<16x128xf32>
    %106 = arith.mulf %93, %105 : vector<16x128xf32>
    %c0_37 = arith.constant 0 : index
    %c640_38 = arith.constant 640 : index
    %107 = vector.load %arg2[%c0_37, %c640_38] : memref<128x1792xbf16, #tpu.memory_space<vmem>>, vector<128x128xbf16>
    %108 = arith.truncf %106 : vector<16x128xf32> to vector<16x128xbf16>
    %cst_39 = arith.constant dense<0.000000e+00> : vector<16x128xf32>
    %109 = tpu.matmul %108, %107, %cst_39 {dimension_numbers = #tpu.dot_dimension_numbers<[1], [0], [0], [1], [0, 0, 1, 1], [], []>} : vector<16x128xbf16>, vector<128x128xbf16>, vector<16x128xf32> -> vector<16x128xf32>
    %c0_40 = arith.constant 0 : index
    %c896 = arith.constant 896 : index
    %110 = vector.load %arg3[%c0_40, %c896] : memref<1x3072xf32, #tpu.memory_space<vmem>>, vector<1x128xf32>
    %111 = vector.broadcast %110 : vector<1x128xf32> to vector<16x128xf32>
    %112 = arith.addf %109, %111 : vector<16x128xf32>
    %113 = arith.addf %87, %112 : vector<16x128xf32>
    %c0_41 = arith.constant 0 : index
    %c1024 = arith.constant 1024 : index
    %114 = vector.load %arg3[%c0_41, %c1024] : memref<1x3072xf32, #tpu.memory_space<vmem>>, vector<1x128xf32>
    %c0_42 = arith.constant 0 : index
    %c1152 = arith.constant 1152 : index
    %115 = vector.load %arg3[%c0_42, %c1152] : memref<1x3072xf32, #tpu.memory_space<vmem>>, vector<1x128xf32>
    %cst_43 = arith.constant dense<0.000000e+00> : vector<16xf32>
    %116 = vector.multi_reduction <add>, %113, %cst_43 [1] : vector<16x128xf32> to vector<16xf32>
    %117 = vector.shape_cast %116 : vector<16xf32> to vector<16x1xf32>
    %cst_44 = arith.constant 3.125000e-02 : f32
    %118 = vector.broadcast %cst_44 : f32 to vector<16x1xf32>
    %119 = arith.mulf %117, %118 : vector<16x1xf32>
    %120 = vector.broadcast %119 : vector<16x1xf32> to vector<16x128xf32>
    %121 = arith.subf %113, %120 : vector<16x128xf32>
    %122 = vector.broadcast %4 : vector<1x128xf32> to vector<16x128xf32>
    %123 = arith.mulf %121, %122 : vector<16x128xf32>
    %124 = arith.mulf %123, %123 : vector<16x128xf32>
    %cst_45 = arith.constant dense<0.000000e+00> : vector<16xf32>
    %125 = vector.multi_reduction <add>, %124, %cst_45 [1] : vector<16x128xf32> to vector<16xf32>
    %126 = vector.shape_cast %125 : vector<16xf32> to vector<16x1xf32>
    %cst_46 = arith.constant 3.125000e-02 : f32
    %127 = vector.broadcast %cst_46 : f32 to vector<16x1xf32>
    %128 = arith.mulf %126, %127 : vector<16x1xf32>
    %cst_47 = arith.constant 9.99999996E-13 : f32
    %129 = vector.broadcast %cst_47 : f32 to vector<16x1xf32>
    %130 = arith.addf %128, %129 : vector<16x1xf32>
    %131 = math.rsqrt %130 : vector<16x1xf32>
    %132 = vector.broadcast %131 : vector<16x1xf32> to vector<16x128xf32>
    %133 = arith.mulf %123, %132 : vector<16x128xf32>
    %134 = vector.broadcast %114 : vector<1x128xf32> to vector<16x128xf32>
    %135 = arith.mulf %133, %134 : vector<16x128xf32>
    %136 = vector.broadcast %115 : vector<1x128xf32> to vector<16x128xf32>
    %137 = arith.addf %135, %136 : vector<16x128xf32>
    %c0_48 = arith.constant 0 : index
    %c768_49 = arith.constant 768 : index
    %138 = vector.load %arg2[%c0_48, %c768_49] : memref<128x1792xbf16, #tpu.memory_space<vmem>>, vector<128x384xbf16>
    %139 = arith.truncf %137 : vector<16x128xf32> to vector<16x128xbf16>
    %cst_50 = arith.constant dense<0.000000e+00> : vector<16x384xf32>
    %140 = tpu.matmul %139, %138, %cst_50 {dimension_numbers = #tpu.dot_dimension_numbers<[1], [0], [0], [1], [0, 0, 1, 1], [], []>} : vector<16x128xbf16>, vector<128x384xbf16>, vector<16x384xf32> -> vector<16x384xf32>
    %c0_51 = arith.constant 0 : index
    %c1280 = arith.constant 1280 : index
    %141 = vector.load %arg3[%c0_51, %c1280] : memref<1x3072xf32, #tpu.memory_space<vmem>>, vector<1x384xf32>
    %142 = vector.broadcast %141 : vector<1x384xf32> to vector<16x384xf32>
    %143 = arith.addf %140, %142 : vector<16x384xf32>
    %144 = vector.extract_strided_slice %143 {offsets = [0, 0], sizes = [16, 128], strides = [1, 1]} : vector<16x384xf32> to vector<16x128xf32>
    %145 = vector.extract_strided_slice %143 {offsets = [0, 128], sizes = [16, 128], strides = [1, 1]} : vector<16x384xf32> to vector<16x128xf32>
    %146 = vector.extract_strided_slice %143 {offsets = [0, 256], sizes = [16, 128], strides = [1, 1]} : vector<16x384xf32> to vector<16x128xf32>
    %147 = arith.truncf %144 : vector<16x128xf32> to vector<16x128xbf16>
    %148 = arith.truncf %145 : vector<16x128xf32> to vector<16x128xbf16>
    %cst_52 = arith.constant dense<0.000000e+00> : vector<16x16xf32>
    %149 = tpu.matmul %147, %148, %cst_52 {dimension_numbers = #tpu.dot_dimension_numbers<[1], [1], [0], [0], [0, 0, 1, 0], [], []>} : vector<16x128xbf16>, vector<16x128xbf16>, vector<16x16xf32> -> vector<16x16xf32>
    %150 = arith.addf %149, %30 : vector<16x16xf32>
    %cst_53 = arith.constant dense<0xFF800000> : vector<16xf32>
    %151 = vector.multi_reduction <maximumf>, %150, %cst_53 [1] : vector<16x16xf32> to vector<16xf32>
    %152 = vector.shape_cast %151 : vector<16xf32> to vector<16x1xf32>
    %153 = vector.broadcast %152 : vector<16x1xf32> to vector<16x16xf32>
    %154 = arith.subf %150, %153 : vector<16x16xf32>
    %155 = math.exp %154 : vector<16x16xf32>
    %cst_54 = arith.constant dense<0.000000e+00> : vector<16xf32>
    %156 = vector.multi_reduction <add>, %155, %cst_54 [1] : vector<16x16xf32> to vector<16xf32>
    %157 = vector.shape_cast %156 : vector<16xf32> to vector<16x1xf32>
    %158 = tpu.reciprocal %157 {approx = true} : vector<16x1xf32> -> vector<16x1xf32>
    %159 = vector.broadcast %158 : vector<16x1xf32> to vector<16x16xf32>
    %160 = arith.mulf %155, %159 : vector<16x16xf32>
    %161 = arith.truncf %160 : vector<16x16xf32> to vector<16x16xbf16>
    %162 = arith.truncf %146 : vector<16x128xf32> to vector<16x128xbf16>
    %cst_55 = arith.constant dense<0.000000e+00> : vector<16x128xf32>
    %163 = tpu.matmul %161, %162, %cst_55 {dimension_numbers = #tpu.dot_dimension_numbers<[1], [0], [0], [1], [0, 0, 1, 1], [], []>} : vector<16x16xbf16>, vector<16x128xbf16>, vector<16x128xf32> -> vector<16x128xf32>
    %c0_56 = arith.constant 0 : index
    %c1152_57 = arith.constant 1152 : index
    %164 = vector.load %arg2[%c0_56, %c1152_57] : memref<128x1792xbf16, #tpu.memory_space<vmem>>, vector<128x128xbf16>
    %165 = arith.truncf %163 : vector<16x128xf32> to vector<16x128xbf16>
    %cst_58 = arith.constant dense<0.000000e+00> : vector<16x128xf32>
    %166 = tpu.matmul %165, %164, %cst_58 {dimension_numbers = #tpu.dot_dimension_numbers<[1], [0], [0], [1], [0, 0, 1, 1], [], []>} : vector<16x128xbf16>, vector<128x128xbf16>, vector<16x128xf32> -> vector<16x128xf32>
    %c0_59 = arith.constant 0 : index
    %c1664 = arith.constant 1664 : index
    %167 = vector.load %arg3[%c0_59, %c1664] : memref<1x3072xf32, #tpu.memory_space<vmem>>, vector<1x128xf32>
    %168 = vector.broadcast %167 : vector<1x128xf32> to vector<16x128xf32>
    %169 = arith.addf %166, %168 : vector<16x128xf32>
    %170 = arith.addf %137, %169 : vector<16x128xf32>
    %c0_60 = arith.constant 0 : index
    %c1792 = arith.constant 1792 : index
    %171 = vector.load %arg3[%c0_60, %c1792] : memref<1x3072xf32, #tpu.memory_space<vmem>>, vector<1x128xf32>
    %c0_61 = arith.constant 0 : index
    %c1920 = arith.constant 1920 : index
    %172 = vector.load %arg3[%c0_61, %c1920] : memref<1x3072xf32, #tpu.memory_space<vmem>>, vector<1x128xf32>
    %cst_62 = arith.constant dense<0.000000e+00> : vector<16xf32>
    %173 = vector.multi_reduction <add>, %170, %cst_62 [1] : vector<16x128xf32> to vector<16xf32>
    %174 = vector.shape_cast %173 : vector<16xf32> to vector<16x1xf32>
    %cst_63 = arith.constant 3.125000e-02 : f32
    %175 = vector.broadcast %cst_63 : f32 to vector<16x1xf32>
    %176 = arith.mulf %174, %175 : vector<16x1xf32>
    %177 = vector.broadcast %176 : vector<16x1xf32> to vector<16x128xf32>
    %178 = arith.subf %170, %177 : vector<16x128xf32>
    %179 = vector.broadcast %4 : vector<1x128xf32> to vector<16x128xf32>
    %180 = arith.mulf %178, %179 : vector<16x128xf32>
    %181 = arith.mulf %180, %180 : vector<16x128xf32>
    %cst_64 = arith.constant dense<0.000000e+00> : vector<16xf32>
    %182 = vector.multi_reduction <add>, %181, %cst_64 [1] : vector<16x128xf32> to vector<16xf32>
    %183 = vector.shape_cast %182 : vector<16xf32> to vector<16x1xf32>
    %cst_65 = arith.constant 3.125000e-02 : f32
    %184 = vector.broadcast %cst_65 : f32 to vector<16x1xf32>
    %185 = arith.mulf %183, %184 : vector<16x1xf32>
    %cst_66 = arith.constant 9.99999996E-13 : f32
    %186 = vector.broadcast %cst_66 : f32 to vector<16x1xf32>
    %187 = arith.addf %185, %186 : vector<16x1xf32>
    %188 = math.rsqrt %187 : vector<16x1xf32>
    %189 = vector.broadcast %188 : vector<16x1xf32> to vector<16x128xf32>
    %190 = arith.mulf %180, %189 : vector<16x128xf32>
    %191 = vector.broadcast %171 : vector<1x128xf32> to vector<16x128xf32>
    %192 = arith.mulf %190, %191 : vector<16x128xf32>
    %193 = vector.broadcast %172 : vector<1x128xf32> to vector<16x128xf32>
    %194 = arith.addf %192, %193 : vector<16x128xf32>
    %c0_67 = arith.constant 0 : index
    %c1280_68 = arith.constant 1280 : index
    %195 = vector.load %arg2[%c0_67, %c1280_68] : memref<128x1792xbf16, #tpu.memory_space<vmem>>, vector<128x128xbf16>
    %196 = arith.truncf %194 : vector<16x128xf32> to vector<16x128xbf16>
    %cst_69 = arith.constant dense<0.000000e+00> : vector<16x128xf32>
    %197 = tpu.matmul %196, %195, %cst_69 {dimension_numbers = #tpu.dot_dimension_numbers<[1], [0], [0], [1], [0, 0, 1, 1], [], []>} : vector<16x128xbf16>, vector<128x128xbf16>, vector<16x128xf32> -> vector<16x128xf32>
    %c0_70 = arith.constant 0 : index
    %c2048 = arith.constant 2048 : index
    %198 = vector.load %arg3[%c0_70, %c2048] : memref<1x3072xf32, #tpu.memory_space<vmem>>, vector<1x128xf32>
    %199 = vector.broadcast %198 : vector<1x128xf32> to vector<16x128xf32>
    %200 = arith.addf %197, %199 : vector<16x128xf32>
    %201 = arith.mulf %200, %200 : vector<16x128xf32>
    %202 = arith.mulf %200, %201 : vector<16x128xf32>
    %cst_71 = arith.constant 4.471500e-02 : f32
    %203 = vector.broadcast %cst_71 : f32 to vector<16x128xf32>
    %204 = arith.mulf %203, %202 : vector<16x128xf32>
    %205 = arith.addf %200, %204 : vector<16x128xf32>
    %cst_72 = arith.constant 0.797884583 : f32
    %206 = vector.broadcast %cst_72 : f32 to vector<16x128xf32>
    %207 = arith.mulf %206, %205 : vector<16x128xf32>
    %208 = math.tanh %207 : vector<16x128xf32>
    %cst_73 = arith.constant 1.000000e+00 : f32
    %209 = vector.broadcast %cst_73 : f32 to vector<16x128xf32>
    %210 = arith.addf %209, %208 : vector<16x128xf32>
    %cst_74 = arith.constant 5.000000e-01 : f32
    %211 = vector.broadcast %cst_74 : f32 to vector<16x128xf32>
    %212 = arith.mulf %211, %210 : vector<16x128xf32>
    %213 = arith.mulf %200, %212 : vector<16x128xf32>
    %c0_75 = arith.constant 0 : index
    %c1408 = arith.constant 1408 : index
    %214 = vector.load %arg2[%c0_75, %c1408] : memref<128x1792xbf16, #tpu.memory_space<vmem>>, vector<128x128xbf16>
    %215 = arith.truncf %213 : vector<16x128xf32> to vector<16x128xbf16>
    %cst_76 = arith.constant dense<0.000000e+00> : vector<16x128xf32>
    %216 = tpu.matmul %215, %214, %cst_76 {dimension_numbers = #tpu.dot_dimension_numbers<[1], [0], [0], [1], [0, 0, 1, 1], [], []>} : vector<16x128xbf16>, vector<128x128xbf16>, vector<16x128xf32> -> vector<16x128xf32>
    %c0_77 = arith.constant 0 : index
    %c2176 = arith.constant 2176 : index
    %217 = vector.load %arg3[%c0_77, %c2176] : memref<1x3072xf32, #tpu.memory_space<vmem>>, vector<1x128xf32>
    %218 = vector.broadcast %217 : vector<1x128xf32> to vector<16x128xf32>
    %219 = arith.addf %216, %218 : vector<16x128xf32>
    %220 = arith.addf %194, %219 : vector<16x128xf32>
    %c0_78 = arith.constant 0 : index
    %c2304 = arith.constant 2304 : index
    %221 = vector.load %arg3[%c0_78, %c2304] : memref<1x3072xf32, #tpu.memory_space<vmem>>, vector<1x128xf32>
    %c0_79 = arith.constant 0 : index
    %c2432 = arith.constant 2432 : index
    %222 = vector.load %arg3[%c0_79, %c2432] : memref<1x3072xf32, #tpu.memory_space<vmem>>, vector<1x128xf32>
    %cst_80 = arith.constant dense<0.000000e+00> : vector<16xf32>
    %223 = vector.multi_reduction <add>, %220, %cst_80 [1] : vector<16x128xf32> to vector<16xf32>
    %224 = vector.shape_cast %223 : vector<16xf32> to vector<16x1xf32>
    %cst_81 = arith.constant 3.125000e-02 : f32
    %225 = vector.broadcast %cst_81 : f32 to vector<16x1xf32>
    %226 = arith.mulf %224, %225 : vector<16x1xf32>
    %227 = vector.broadcast %226 : vector<16x1xf32> to vector<16x128xf32>
    %228 = arith.subf %220, %227 : vector<16x128xf32>
    %229 = vector.broadcast %4 : vector<1x128xf32> to vector<16x128xf32>
    %230 = arith.mulf %228, %229 : vector<16x128xf32>
    %231 = arith.mulf %230, %230 : vector<16x128xf32>
    %cst_82 = arith.constant dense<0.000000e+00> : vector<16xf32>
    %232 = vector.multi_reduction <add>, %231, %cst_82 [1] : vector<16x128xf32> to vector<16xf32>
    %233 = vector.shape_cast %232 : vector<16xf32> to vector<16x1xf32>
    %cst_83 = arith.constant 3.125000e-02 : f32
    %234 = vector.broadcast %cst_83 : f32 to vector<16x1xf32>
    %235 = arith.mulf %233, %234 : vector<16x1xf32>
    %cst_84 = arith.constant 9.99999996E-13 : f32
    %236 = vector.broadcast %cst_84 : f32 to vector<16x1xf32>
    %237 = arith.addf %235, %236 : vector<16x1xf32>
    %238 = math.rsqrt %237 : vector<16x1xf32>
    %239 = vector.broadcast %238 : vector<16x1xf32> to vector<16x128xf32>
    %240 = arith.mulf %230, %239 : vector<16x128xf32>
    %241 = vector.broadcast %221 : vector<1x128xf32> to vector<16x128xf32>
    %242 = arith.mulf %240, %241 : vector<16x128xf32>
    %243 = vector.broadcast %222 : vector<1x128xf32> to vector<16x128xf32>
    %244 = arith.addf %242, %243 : vector<16x128xf32>
    %c0_85 = arith.constant 0 : index
    %c1536 = arith.constant 1536 : index
    %245 = vector.load %arg2[%c0_85, %c1536] : memref<128x1792xbf16, #tpu.memory_space<vmem>>, vector<128x128xbf16>
    %246 = arith.truncf %244 : vector<16x128xf32> to vector<16x128xbf16>
    %cst_86 = arith.constant dense<0.000000e+00> : vector<16x128xf32>
    %247 = tpu.matmul %246, %245, %cst_86 {dimension_numbers = #tpu.dot_dimension_numbers<[1], [0], [0], [1], [0, 0, 1, 1], [], []>} : vector<16x128xbf16>, vector<128x128xbf16>, vector<16x128xf32> -> vector<16x128xf32>
    %c0_87 = arith.constant 0 : index
    %c2816 = arith.constant 2816 : index
    %248 = vector.load %arg3[%c0_87, %c2816] : memref<1x3072xf32, #tpu.memory_space<vmem>>, vector<1x128xf32>
    %249 = vector.broadcast %248 : vector<1x128xf32> to vector<16x128xf32>
    %250 = arith.addf %247, %249 : vector<16x128xf32>
    %251 = math.tanh %250 : vector<16x128xf32>
    %c0_88 = arith.constant 0 : index
    %c1664_89 = arith.constant 1664 : index
    %252 = vector.load %arg2[%c0_88, %c1664_89] : memref<128x1792xbf16, #tpu.memory_space<vmem>>, vector<128x128xbf16>
    %253 = arith.truncf %251 : vector<16x128xf32> to vector<16x128xbf16>
    %cst_90 = arith.constant dense<0.000000e+00> : vector<16x128xf32>
    %254 = tpu.matmul %253, %252, %cst_90 {dimension_numbers = #tpu.dot_dimension_numbers<[1], [0], [0], [1], [0, 0, 1, 1], [], []>} : vector<16x128xbf16>, vector<128x128xbf16>, vector<16x128xf32> -> vector<16x128xf32>
    %c0_91 = arith.constant 0 : index
    %c2944 = arith.constant 2944 : index
    %255 = vector.load %arg3[%c0_91, %c2944] : memref<1x3072xf32, #tpu.memory_space<vmem>>, vector<1x128xf32>
    %256 = vector.broadcast %255 : vector<1x128xf32> to vector<16x128xf32>
    %257 = arith.addf %254, %256 : vector<16x128xf32>
    %cst_92 = arith.constant 0.000000e+00 : f32
    %258 = vector.broadcast %cst_92 : f32 to vector<16x128xf32>
    %259 = arith.maximumf %257, %258 : vector<16x128xf32>
    %c0_93 = arith.constant 0 : index
    %c0_94 = arith.constant 0 : index
    %260 = vector.load %arg4[%c0_93, %c0_94] : memref<16x128xf32, #tpu.memory_space<vmem>>, vector<16x128xf32>
    tpu.vector_store %arg4[%c0_93, %c0_94], %259 {strides = array<i32>} : memref<16x128xf32, #tpu.memory_space<vmem>>, vector<16x128xf32>,
    return
  }
}

</mosaic_0001>

<llo_original>
// kernel: text_model_forward.1
$region0: #{text_model_forward.1}
  #allocation0 [shape = 'u32[]', space=smem, size = 0x4, offset = 0x4, fixed_abs, tag = 'smem constant byte address 0x4 - core index']
  #allocation1 [shape = 'u32[144,128]{1,0:T(1,128)}', space=vmem, size = 0x12000, scoped, tag = 'internal scratch']
  %s0 = inlined_call_operand.vmem [shape: f32[16,128], index: 0, kind: input, shape index: {}]
  %s1 = inlined_call_operand.vmem [shape: f32[16,16], index: 1, kind: input, shape index: {}]
  %s2 = inlined_call_operand.hbm [shape: bf16[128,1792], index: 2, kind: input, shape index: {}]
  %s3 = inlined_call_operand.vmem [shape: f32[1,3072], index: 3, kind: input, shape index: {}]
  %s4 = inlined_call_operand.vmem [shape: f32[16,128], index: 4, kind: output, shape index: {}]
  %s5 = sld [smem:[#allocation0]]
  $region30: #{text_model_forward.1} parent=0
    _
  %s7 = ssub.s32 1, %s5
  %s8 = scalar_select 0, %s7, %s5
  $region1: #{text_model_forward.1} parent=0
    #allocation2 [shape = 'u8[458752]{0}', space=vmem, size = 0x70000, scoped, tag = 'input window, operand 2, single buffered']
    #allocation3 [shape = 's32[1]{0}', space=sflag, size = 0x4, scoped, tag = 'scoped memory for text_model_forward.1']
    %9 = vsyncpa [#allocation3], 0
    // Predicated region
    $region2: #{text_model_forward.1} parent=1 // pred_check
      _
    $region3: #{text_model_forward.1} parent=1 // pred_check_branch
      %11 = sbr.rel (0) target = $region5
    $region4: #{text_model_forward.1} parent=1 // pred_region
      _
    $region5: #{text_model_forward.1} parent=1 // pred_fallthru
      _
    // Predicated region
    $region6: #{text_model_forward.1} parent=1 // pred_check
      _
    $region7: #{text_model_forward.1} parent=1 // pred_check_branch
      %13 = sbr.rel (0) target = $region9
    $region8: #{text_model_forward.1} parent=1 // pred_region
      _
    $region9: #{text_model_forward.1} parent=1 // pred_fallthru
      _
    // Predicated region
    $region10: #{text_model_forward.1} parent=1 // pred_check
      _
    $region11: #{text_model_forward.1} parent=1 // pred_check_branch
      %15 = sbr.rel (0) target = $region13
    $region12: #{text_model_forward.1} parent=1 // pred_region
      %s17 = ssub.s32 14336, 14336
      %18 = vsyncadd [#allocation3], %s17
      %s19 = sshll.u32 [#allocation2], 4
      %s20 = int_to_ptr.vmem [resolvable:$true] %s19
      %25 = dma.hbm_to_vmem [thread:$0]  %s2, 14336, %s20, [#allocation3], 896, 896, 56
    $region13: #{text_model_forward.1} parent=1 // pred_fallthru
      _
    // Predicated region
    $region14: #{text_model_forward.1} parent=1 // pred_check
      _
    $region15: #{text_model_forward.1} parent=1 // pred_check_branch
      %27 = sbr.rel (0) target = $region17
    $region16: #{text_model_forward.1} parent=1 // pred_region
      _
    $region17: #{text_model_forward.1} parent=1 // pred_fallthru
      _
    // Predicated region
    $region18: #{text_model_forward.1} parent=1 // pred_check
      _
    $region19: #{text_model_forward.1} parent=1 // pred_check_branch
      %29 = sbr.rel (0) target = $region21
    $region20: #{text_model_forward.1} parent=1 // pred_region
      %30 = dma.done [#allocation3], 14336
    $region21: #{text_model_forward.1} parent=1 // pred_fallthru
      _
    %v32 = vlaneseq
    %v33 = vand.u32 %v32, 127
    %vm34 = vcmp.lt.s32.totalorder %v33, 32
    %v35 = vsel %vm34, 1, 0
    %v36 = vcvt.s32.f32 %v35
    %v37 = vld [vmem:[%s0] sm:$0xff]
    %v38 = vld [vmem:[%s0 + $0x8] sm:$0xff]
    %v39 = vld [vmem:[%s3 + $0x14] sm:$0x1]
    %v40 = vld [vmem:[%s3 + $0x15] sm:$0x1]
    %41 = vadd.xlane.f32.xlu0 %v37
    %v42 = vpop.xlane.xlu0 %41
    %43 = vadd.xlane.f32.xlu0 %v38
    %v44 = vpop.xlane.xlu0 %43
    %v45 = vmul.f32 %v42, 0.03125
    %v46 = vmul.f32 %v44, 0.03125
    %v47 = vsub.f32 %v37, %v45
    %v48 = vsub.f32 %v38, %v46
    %v49 = vmul.f32 %v47, %v36
    %v50 = vmul.f32 %v48, %v36
    %v51 = vmul.f32 %v49, %v49
    %v52 = vmul.f32 %v50, %v50
    %53 = vadd.xlane.f32.xlu0 %v51
    %v54 = vpop.xlane.xlu0 %53
    %55 = vadd.xlane.f32.xlu0 %v52
    %v56 = vpop.xlane.xlu0 %55
    %v57 = vmul.f32 %v54, 0.03125
    %v58 = vmul.f32 %v56, 0.03125
    %v59 = vadd.f32 %v57, 1e-12
    %v60 = vadd.f32 %v58, 1e-12
    %v61 = vrsqrt.pop %v59
    %v62 = vrsqrt.pop %v60
    %v63 = vmul.f32 %v49, %v61
    %v64 = vmul.f32 %v50, %v62
    %v66 = vlaneseq
    %v67 = vshrl.u32 %v66, 7
    %v68 = vsub.s32 0, %v67
    %v69 = vrot.slane %v39, %v68
    %v71 = vmul.f32 %v63, %v69
    %v72 = vmul.f32 %v64, %v69
    %v74 = vlaneseq
    %v75 = vshrl.u32 %v74, 7
    %v76 = vsub.s32 0, %v75
    %v77 = vrot.slane %v40, %v76
    %v79 = vadd.f32 %v71, %v77
    %v80 = vadd.f32 %v72, %v77
    %v81 = vld [vmem:[%s1] sm:$0xff]
    %v82 = vld [vmem:[%s1 + $0x8] sm:$0xff]
    %v83 = vld [vmem:[#allocation2] sm:$0xff]
    %v84 = vld [vmem:[#allocation2 + $0x8] sm:$0xf]
    %v85 = vld [vmem:[#allocation2 + $0x38] sm:$0xff]
    %v86 = vld [vmem:[#allocation2 + $0x40] sm:$0xf]
    %v87 = vld [vmem:[#allocation2 + $0x70] sm:$0xff]
    %v88 = vld [vmem:[#allocation2 + $0x78] sm:$0xf]
    %v89 = vld [vmem:[#allocation2 + $0xa8] sm:$0xff]
    %v90 = vld [vmem:[#allocation2 + $0xb0] sm:$0xf]
    %v91 = vld [vmem:[#allocation2 + $0xe0] sm:$0xff]
    %v92 = vld [vmem:[#allocation2 + $0xe8] sm:$0xf]
    %v93 = vld [vmem:[#allocation2 + $0x118] sm:$0xff]
    %v94 = vld [vmem:[#allocation2 + $0x120] sm:$0xf]
    %v95 = vld [vmem:[#allocation2 + $0x150] sm:$0xff]
    %v96 = vld [vmem:[#allocation2 + $0x158] sm:$0xf]
    %v97 = vld [vmem:[#allocation2 + $0x188] sm:$0xff]
    %v98 = vld [vmem:[#allocation2 + $0x190] sm:$0xf]
    %v99 = vld [vmem:[#allocation2 + $0x1c0] sm:$0xff]
    %v100 = vld [vmem:[#allocation2 + $0x1c8] sm:$0xf]
    %v101 = vld [vmem:[#allocation2 + $0x1f8] sm:$0xff]
    %v102 = vld [vmem:[#allocation2 + $0x200] sm:$0xf]
    %v103 = vld [vmem:[#allocation2 + $0x230] sm:$0xff]
    %v104 = vld [vmem:[#allocation2 + $0x238] sm:$0xf]
    %v105 = vld [vmem:[#allocation2 + $0x268] sm:$0xff]
    %v106 = vld [vmem:[#allocation2 + $0x270] sm:$0xf]
    %v107 = vld [vmem:[#allocation2 + $0x2a0] sm:$0xff]
    %v108 = vld [vmem:[#allocation2 + $0x2a8] sm:$0xf]
    %v109 = vld [vmem:[#allocation2 + $0x2d8] sm:$0xff]
    %v110 = vld [vmem:[#allocation2 + $0x2e0] sm:$0xf]
    %v111 = vld [vmem:[#allocation2 + $0x310] sm:$0xff]
    %v112 = vld [vmem:[#allocation2 + $0x318] sm:$0xf]
    %v113 = vld [vmem:[#allocation2 + $0x348] sm:$0xff]
    %v114 = vld [vmem:[#allocation2 + $0x350] sm:$0xf]
    %v115 = vpack.c.bf16 %v80, %v79
    %v116 = vld [vmem:[%s3] sm:$0x7]
    %v118 = vlaneseq
    %v119 = vshrl.u32 %v118, 7
    %v120 = vsub.s32 0, %v119
    %v121 = vrot.slane %v116, %v120
    %v122 = vlaneseq
    %v123 = vshrl.u32 %v122, 7
    %v124 = vsub.s32 1, %v123
    %v125 = vrot.slane %v116, %v124
    %v126 = vlaneseq
    %v127 = vshrl.u32 %v126, 7
    %v128 = vsub.s32 2, %v127
    %v129 = vrot.slane %v116, %v128
    %v165 = vunpack.c.l.b16 %v83
    %v166 = vunpack.c.h.b16 %v83
    %v167 = vunpack.c.l.b16 %v84
    %v168 = vunpack.c.l.b16 %v85
    %v169 = vunpack.c.h.b16 %v85
    %v170 = vunpack.c.l.b16 %v86
    %v171 = vunpack.c.l.b16 %v87
    %v172 = vunpack.c.h.b16 %v87
    %v173 = vunpack.c.l.b16 %v88
    %v174 = vunpack.c.l.b16 %v89
    %v175 = vunpack.c.h.b16 %v89
    %v176 = vunpack.c.l.b16 %v90
    %v177 = vunpack.c.l.b16 %v91
    %v178 = vunpack.c.h.b16 %v91
    %v179 = vunpack.c.l.b16 %v92
    %v180 = vunpack.c.l.b16 %v93
    %v181 = vunpack.c.h.b16 %v93
    %v182 = vunpack.c.l.b16 %v94
    %v183 = vunpack.c.l.b16 %v95
    %v184 = vunpack.c.h.b16 %v95
    %v185 = vunpack.c.l.b16 %v96
    %v186 = vunpack.c.l.b16 %v97
    %v187 = vunpack.c.h.b16 %v97
    %v188 = vunpack.c.l.b16 %v98
    %v189 = vunpack.c.l.b16 %v99
    %v190 = vunpack.c.h.b16 %v99
    %v191 = vunpack.c.l.b16 %v100
    %v192 = vunpack.c.l.b16 %v101
    %v193 = vunpack.c.h.b16 %v101
    %v194 = vunpack.c.l.b16 %v102
    %v195 = vunpack.c.l.b16 %v103
    %v196 = vunpack.c.h.b16 %v103
    %v197 = vunpack.c.l.b16 %v104
    %v198 = vunpack.c.l.b16 %v105
    %v199 = vunpack.c.h.b16 %v105
    %v200 = vunpack.c.l.b16 %v106
    %v201 = vunpack.c.l.b16 %v107
    %v202 = vunpack.c.h.b16 %v107
    %v203 = vunpack.c.l.b16 %v108
    %v204 = vunpack.c.l.b16 %v109
    %v205 = vunpack.c.h.b16 %v109
    %v206 = vunpack.c.l.b16 %v110
    %v207 = vunpack.c.l.b16 %v111
    %v208 = vunpack.c.h.b16 %v111
    %v209 = vunpack.c.l.b16 %v112
    %v210 = vunpack.c.l.b16 %v113
    %v211 = vunpack.c.h.b16 %v113
    %v212 = vunpack.c.l.b16 %v114
    %v213 = vpack.c.b16 %v168, %v165
    %v214 = vpack.c.b16 %v169, %v166
    %v215 = vpack.c.b16 %v170, %v167
    %v216 = vpack.c.b16 %v174, %v171
    %v217 = vpack.c.b16 %v175, %v172
    %v218 = vpack.c.b16 %v176, %v173
    %v219 = vpack.c.b16 %v180, %v177
    %v220 = vpack.c.b16 %v181, %v178
    %v221 = vpack.c.b16 %v182, %v179
    %v222 = vpack.c.b16 %v186, %v183
    %v223 = vpack.c.b16 %v187, %v184
    %v224 = vpack.c.b16 %v188, %v185
    %v225 = vpack.c.b16 %v192, %v189
    %v226 = vpack.c.b16 %v193, %v190
    %v227 = vpack.c.b16 %v194, %v191
    %v228 = vpack.c.b16 %v198, %v195
    %v229 = vpack.c.b16 %v199, %v196
    %v230 = vpack.c.b16 %v200, %v197
    %v231 = vpack.c.b16 %v204, %v201
    %v232 = vpack.c.b16 %v205, %v202
    %v233 = vpack.c.b16 %v206, %v203
    %v234 = vpack.c.b16 %v210, %v207
    %v235 = vpack.c.b16 %v211, %v208
    %v236 = vpack.c.b16 %v212, %v209
    %261 = vmatprep.subr.bf16.mxu0 %v214
    %262 = vmatpush1.bf16.msra.mxu0 %v213
    %263 = vmatprep.subr.bf16.mxu0 %v217
    %264 = vmatpush1.bf16.msra.mxu0 %v216
    %265 = vmatprep.subr.bf16.mxu0 %v220
    %266 = vmatpush1.bf16.msra.mxu0 %v219
    %267 = vmatprep.subr.bf16.mxu0 %v223
    %268 = vmatpush1.bf16.msra.mxu0 %v222
    %269 = vmatprep.subr.bf16.mxu0 %v226
    %270 = vmatpush1.bf16.msra.mxu0 %v225
    %271 = vmatprep.subr.bf16.mxu0 %v229
    %272 = vmatpush1.bf16.msra.mxu0 %v228
    %273 = vmatprep.subr.bf16.mxu0 %v232
    %274 = vmatpush1.bf16.msra.mxu0 %v231
    %275 = vmatprep.subr.bf16.mxu0 %v235
    %276 = vmatpush1.bf16.msra.mxu0 %v234
    %277 = vmatprep.subr.bf16.mxu0 0
    %278 = vmatpush1.bf16.msra.mxu0 0
    %279 = vmatprep.subr.bf16.mxu0 0
    %280 = vmatpush1.bf16.msra.mxu0 0
    %281 = vmatprep.subr.bf16.mxu0 0
    %282 = vmatpush1.bf16.msra.mxu0 0
    %283 = vmatprep.subr.bf16.mxu0 0
    %284 = vmatpush1.bf16.msra.mxu0 0
    %285 = vmatprep.subr.bf16.mxu0 0
    %286 = vmatpush1.bf16.msra.mxu0 0
    %287 = vmatprep.subr.bf16.mxu0 0
    %288 = vmatpush1.bf16.msra.mxu0 0
    %289 = vmatprep.subr.bf16.mxu0 0
    %290 = vmatpush1.bf16.msra.mxu0 0
    %291 = vmatprep.subr.bf16.mxu0 0
    %292 = vmatpush1.bf16.msra.mxu0 0
    %293 = vmatprep.mubr.bf16.mxu0 0
    %294 = vmatmul.mubr.bf16.gmra.mrb[0].mxu0 %v115
    %v295 = vpop.f32.mrb[0].mxu0
    %v296 = vadd.f32 %v121, %v295
    %v297 = vpop.f32.mrb[0].mxu0
    %v298 = vadd.f32 %v125, %v297
    %v299 = vpop.f32.mrb[0].mxu0
    %v300 = vadd.f32 %v121, %v299
    %v301 = vpop.f32.mrb[0].mxu0
    %v302 = vadd.f32 %v125, %v301
    %303 = vdwg.mxu0
    %304 = vmatprep.subr.bf16.mxu0 0
    %305 = vmatpush1.bf16.msra.mxu0 %v215
    %306 = vmatprep.subr.bf16.mxu0 0
    %307 = vmatpush1.bf16.msra.mxu0 %v218
    %308 = vmatprep.subr.bf16.mxu0 0
    %309 = vmatpush1.bf16.msra.mxu0 %v221
    %310 = vmatprep.subr.bf16.mxu0 0
    %311 = vmatpush1.bf16.msra.mxu0 %v224
    %312 = vmatprep.subr.bf16.mxu0 0
    %313 = vmatpush1.bf16.msra.mxu0 %v227
    %314 = vmatprep.subr.bf16.mxu0 0
    %315 = vmatpush1.bf16.msra.mxu0 %v230
    %316 = vmatprep.subr.bf16.mxu0 0
    %317 = vmatpush1.bf16.msra.mxu0 %v233
    %318 = vmatprep.subr.bf16.mxu0 0
    %319 = vmatpush1.bf16.msra.mxu0 %v236
    %320 = vmatprep.subr.bf16.mxu0 0
    %321 = vmatpush1.bf16.msra.mxu0 0
    %322 = vmatprep.subr.bf16.mxu0 0
    %323 = vmatpush1.bf16.msra.mxu0 0
    %324 = vmatprep.subr.bf16.mxu0 0
    %325 = vmatpush1.bf16.msra.mxu0 0
    %326 = vmatprep.subr.bf16.mxu0 0
    %327 = vmatpush1.bf16.msra.mxu0 0
    %328 = vmatprep.subr.bf16.mxu0 0
    %329 = vmatpush1.bf16.msra.mxu0 0
    %330 = vmatprep.subr.bf16.mxu0 0
    %331 = vmatpush1.bf16.msra.mxu0 0
    %332 = vmatprep.subr.bf16.mxu0 0
    %333 = vmatpush1.bf16.msra.mxu0 0
    %334 = vmatprep.subr.bf16.mxu0 0
    %335 = vmatpush1.bf16.msra.mxu0 0
    %336 = vmatprep.mubr.bf16.mxu0 0
    %337 = vmatmul.mubr.bf16.gmra.mrb[0].mxu0 %v115
    %v338 = vpop.f32.mrb[0].mxu0
    %v339 = vadd.f32 %v129, %v338
    %v340 = vpop.f32.mrb[0].mxu0
    %v341 = vpop.f32.mrb[0].mxu0
    %v342 = vadd.f32 %v129, %v341
    %v343 = vpop.f32.mrb[0].mxu0
    %344 = vdwg.mxu0
    %v345 = vpack.c.bf16 %v300, %v296
    %v346 = vpack.c.bf16 %v302, %v298
    %347 = vmatprep.subr.bf16.mxu0 0
    %348 = vmatpush1.bf16.xpose.msra.mxu0 %v346
    %349 = vmatprep.subr.bf16.mxu0 0
    %350 = vmatpush1.bf16.xpose.msra.mxu0 0
    %351 = vmatprep.subr.bf16.mxu0 0
    %352 = vmatpush1.bf16.xpose.msra.mxu0 0
    %353 = vmatprep.subr.bf16.mxu0 0
    %354 = vmatpush1.bf16.xpose.msra.mxu0 0
    %355 = vmatprep.subr.bf16.mxu0 0
    %356 = vmatpush1.bf16.xpose.msra.mxu0 0
    %357 = vmatprep.subr.bf16.mxu0 0
    %358 = vmatpush1.bf16.xpose.msra.mxu0 0
    %359 = vmatprep.subr.bf16.mxu0 0
    %360 = vmatpush1.bf16.xpose.msra.mxu0 0
    %361 = vmatprep.subr.bf16.mxu0 0
    %362 = vmatpush1.bf16.xpose.msra.mxu0 0
    %363 = vmatprep.subr.bf16.mxu0 0
    %364 = vmatpush1.bf16.xpose.msra.mxu0 0
    %365 = vmatprep.subr.bf16.mxu0 0
    %366 = vmatpush1.bf16.xpose.msra.mxu0 0
    %367 = vmatprep.subr.bf16.mxu0 0
    %368 = vmatpush1.bf16.xpose.msra.mxu0 0
    %369 = vmatprep.subr.bf16.mxu0 0
    %370 = vmatpush1.bf16.xpose.msra.mxu0 0
    %371 = vmatprep.subr.bf16.mxu0 0
    %372 = vmatpush1.bf16.xpose.msra.mxu0 0
    %373 = vmatprep.subr.bf16.mxu0 0
    %374 = vmatpush1.bf16.xpose.msra.mxu0 0
    %375 = vmatprep.subr.bf16.mxu0 0
    %376 = vmatpush1.bf16.xpose.msra.mxu0 0
    %377 = vmatprep.subr.bf16.mxu0 0
    %378 = vmatpush1.bf16.xpose.msra.mxu0 0
    %379 = vmatprep.mubr.bf16.mxu0 0
    %380 = vmatmul.mubr.bf16.gmra.mrb[0].mxu0 %v345
    %v381 = vpop.f32.mrb[0].mxu0
    %v382 = vadd.f32 %v81, %v381
    %v383 = vpop.f32.mrb[0].mxu0
    %v384 = vpop.f32.mrb[0].mxu0
    %v385 = vadd.f32 %v82, %v384
    %v386 = vpop.f32.mrb[0].mxu0
    %387 = vdwg.mxu0
    %vm388 = vcmask 130048
    %v389 = vsel %vm388, %v382, -inf
    %390 = vmax.xlane.f32.xlu0 %v389
    %v391 = vpop.xlane.xlu0 %390
    %v392 = vsel %vm388, %v385, -inf
    %393 = vmax.xlane.f32.xlu0 %v392
    %v394 = vpop.xlane.xlu0 %393
    %v395 = vsub.f32 %v382, %v391
    %v396 = vsub.f32 %v385, %v394
    %v397 = vmul.f32 %v395, 1.442695
    %v398 = vpow.pop %v397
    %v399 = vmul.f32 %v396, 1.442695
    %v400 = vpow.pop %v399
    %v401 = vsel %vm388, %v398, 0.0
    %402 = vadd.xlane.f32.xlu0 %v401
    %v403 = vpop.xlane.xlu0 %402
    %v404 = vsel %vm388, %v400, 0.0
    %405 = vadd.xlane.f32.xlu0 %v404
    %v406 = vpop.xlane.xlu0 %405
    %v407 = vrcp.pop %v403
    %v408 = vrcp.pop %v406
    %v409 = vmul.f32 %v398, %v407
    %v410 = vmul.f32 %v400, %v408
    %v411 = vpack.c.bf16 %v410, %v409
    %v412 = vpack.c.bf16 %v342, %v339
    %v414 = vsel %vm388, %v411, 0
    %416 = vmatprep.subr.bf16.mxu0 0
    %417 = vmatpush1.bf16.msra.mxu0 %v412
    %418 = vmatprep.subr.bf16.mxu0 0
    %419 = vmatpush1.bf16.msra.mxu0 0
    %420 = vmatprep.subr.bf16.mxu0 0
    %421 = vmatpush1.bf16.msra.mxu0 0
    %422 = vmatprep.subr.bf16.mxu0 0
    %423 = vmatpush1.bf16.msra.mxu0 0
    %424 = vmatprep.subr.bf16.mxu0 0
    %425 = vmatpush1.bf16.msra.mxu0 0
    %426 = vmatprep.subr.bf16.mxu0 0
    %427 = vmatpush1.bf16.msra.mxu0 0
    %428 = vmatprep.subr.bf16.mxu0 0
    %429 = vmatpush1.bf16.msra.mxu0 0
    %430 = vmatprep.subr.bf16.mxu0 0
    %431 = vmatpush1.bf16.msra.mxu0 0
    %432 = vmatprep.subr.bf16.mxu0 0
    %433 = vmatpush1.bf16.msra.mxu0 0
    %434 = vmatprep.subr.bf16.mxu0 0
    %435 = vmatpush1.bf16.msra.mxu0 0
    %436 = vmatprep.subr.bf16.mxu0 0
    %437 = vmatpush1.bf16.msra.mxu0 0
    %438 = vmatprep.subr.bf16.mxu0 0
    %439 = vmatpush1.bf16.msra.mxu0 0
    %440 = vmatprep.subr.bf16.mxu0 0
    %441 = vmatpush1.bf16.msra.mxu0 0
    %442 = vmatprep.subr.bf16.mxu0 0
    %443 = vmatpush1.bf16.msra.mxu0 0
    %444 = vmatprep.subr.bf16.mxu0 0
    %445 = vmatpush1.bf16.msra.mxu0 0
    %446 = vmatprep.subr.bf16.mxu0 0
    %447 = vmatpush1.bf16.msra.mxu0 0
    %448 = vmatprep.mubr.bf16.mxu0 0
    %449 = vmatmul.mubr.bf16.gmra.mrb[0].mxu0 %v414
    %v450 = vpop.f32.mrb[0].mxu0
    %v451 = vadd.f32 0.0, %v450
    %v452 = vpop.f32.mrb[0].mxu0
    %v453 = vpop.f32.mrb[0].mxu0
    %v454 = vadd.f32 0.0, %v453
    %v455 = vpop.f32.mrb[0].mxu0
    %456 = vdwg.mxu0
    %v457 = vld [vmem:[#allocation2 + $0xc] sm:$0xf]
    %v458 = vld [vmem:[#allocation2 + $0x44] sm:$0xf]
    %v459 = vld [vmem:[#allocation2 + $0x7c] sm:$0xf]
    %v460 = vld [vmem:[#allocation2 + $0xb4] sm:$0xf]
    %v461 = vld [vmem:[#allocation2 + $0xec] sm:$0xf]
    %v462 = vld [vmem:[#allocation2 + $0x124] sm:$0xf]
    %v463 = vld [vmem:[#allocation2 + $0x15c] sm:$0xf]
    %v464 = vld [vmem:[#allocation2 + $0x194] sm:$0xf]
    %v465 = vld [vmem:[#allocation2 + $0x1cc] sm:$0xf]
    %v466 = vld [vmem:[#allocation2 + $0x204] sm:$0xf]
    %v467 = vld [vmem:[#allocation2 + $0x23c] sm:$0xf]
    %v468 = vld [vmem:[#allocation2 + $0x274] sm:$0xf]
    %v469 = vld [vmem:[#allocation2 + $0x2ac] sm:$0xf]
    %v470 = vld [vmem:[#allocation2 + $0x2e4] sm:$0xf]
    %v471 = vld [vmem:[#allocation2 + $0x31c] sm:$0xf]
    %v472 = vld [vmem:[#allocation2 + $0x354] sm:$0xf]
    %v473 = vpack.c.bf16 %v454, %v451
    %v474 = vld [vmem:[%s3 + $0x3] sm:$0x1]
    %v476 = vlaneseq
    %v477 = vshrl.u32 %v476, 7
    %v478 = vsub.s32 0, %v477
    %v479 = vrot.slane %v474, %v478
    %v497 = vunpack.c.l.b16 %v457
    %v498 = vunpack.c.l.b16 %v458
    %v499 = vunpack.c.l.b16 %v459
    %v500 = vunpack.c.l.b16 %v460
    %v501 = vunpack.c.l.b16 %v461
    %v502 = vunpack.c.l.b16 %v462
    %v503 = vunpack.c.l.b16 %v463
    %v504 = vunpack.c.l.b16 %v464
    %v505 = vunpack.c.l.b16 %v465
    %v506 = vunpack.c.l.b16 %v466
    %v507 = vunpack.c.l.b16 %v467
    %v508 = vunpack.c.l.b16 %v468
    %v509 = vunpack.c.l.b16 %v469
    %v510 = vunpack.c.l.b16 %v470
    %v511 = vunpack.c.l.b16 %v471
    %v512 = vunpack.c.l.b16 %v472
    %v513 = vpack.c.b16 %v498, %v497
    %v514 = vpack.c.b16 %v500, %v499
    %v515 = vpack.c.b16 %v502, %v501
    %v516 = vpack.c.b16 %v504, %v503
    %v517 = vpack.c.b16 %v506, %v505
    %v518 = vpack.c.b16 %v508, %v507
    %v519 = vpack.c.b16 %v510, %v509
    %v520 = vpack.c.b16 %v512, %v511
    %529 = vmatprep.subr.bf16.mxu0 0
    %530 = vmatpush1.bf16.msra.mxu0 %v513
    %531 = vmatprep.subr.bf16.mxu0 0
    %532 = vmatpush1.bf16.msra.mxu0 %v514
    %533 = vmatprep.subr.bf16.mxu0 0
    %534 = vmatpush1.bf16.msra.mxu0 %v515
    %535 = vmatprep.subr.bf16.mxu0 0
    %536 = vmatpush1.bf16.msra.mxu0 %v516
    %537 = vmatprep.subr.bf16.mxu0 0
    %538 = vmatpush1.bf16.msra.mxu0 %v517
    %539 = vmatprep.subr.bf16.mxu0 0
    %540 = vmatpush1.bf16.msra.mxu0 %v518
    %541 = vmatprep.subr.bf16.mxu0 0
    %542 = vmatpush1.bf16.msra.mxu0 %v519
    %543 = vmatprep.subr.bf16.mxu0 0
    %544 = vmatpush1.bf16.msra.mxu0 %v520
    %545 = vmatprep.subr.bf16.mxu0 0
    %546 = vmatpush1.bf16.msra.mxu0 0
    %547 = vmatprep.subr.bf16.mxu0 0
    %548 = vmatpush1.bf16.msra.mxu0 0
    %549 = vmatprep.subr.bf16.mxu0 0
    %550 = vmatpush1.bf16.msra.mxu0 0
    %551 = vmatprep.subr.bf16.mxu0 0
    %552 = vmatpush1.bf16.msra.mxu0 0
    %553 = vmatprep.subr.bf16.mxu0 0
    %554 = vmatpush1.bf16.msra.mxu0 0
    %555 = vmatprep.subr.bf16.mxu0 0
    %556 = vmatpush1.bf16.msra.mxu0 0
    %557 = vmatprep.subr.bf16.mxu0 0
    %558 = vmatpush1.bf16.msra.mxu0 0
    %559 = vmatprep.subr.bf16.mxu0 0
    %560 = vmatpush1.bf16.msra.mxu0 0
    %561 = vmatprep.mubr.bf16.mxu0 0
    %562 = vmatmul.mubr.bf16.gmra.mrb[0].mxu0 %v473
    %v563 = vpop.f32.mrb[0].mxu0
    %v564 = vadd.f32 %v479, %v563
    %v565 = vpop.f32.mrb[0].mxu0
    %v566 = vpop.f32.mrb[0].mxu0
    %v567 = vadd.f32 %v479, %v566
    %v568 = vpop.f32.mrb[0].mxu0
    %569 = vdwg.mxu0
    %v570 = vadd.f32 %v79, %v564
    %v571 = vadd.f32 %v80, %v567
    %v572 = vld [vmem:[%s3 + $0x4] sm:$0x1]
    %v573 = vld [vmem:[%s3 + $0x5] sm:$0x1]
    %574 = vadd.xlane.f32.xlu0 %v570
    %v575 = vpop.xlane.xlu0 %574
    %576 = vadd.xlane.f32.xlu0 %v571
    %v577 = vpop.xlane.xlu0 %576
    %v578 = vmul.f32 %v575, 0.03125
    %v579 = vmul.f32 %v577, 0.03125
    %v580 = vsub.f32 %v570, %v578
    %v581 = vsub.f32 %v571, %v579
    %v582 = vmul.f32 %v580, %v36
    %v583 = vmul.f32 %v581, %v36
    %v584 = vmul.f32 %v582, %v582
    %v585 = vmul.f32 %v583, %v583
    %586 = vadd.xlane.f32.xlu0 %v584
    %v587 = vpop.xlane.xlu0 %586
    %588 = vadd.xlane.f32.xlu0 %v585
    %v589 = vpop.xlane.xlu0 %588
    %v590 = vmul.f32 %v587, 0.03125
    %v591 = vmul.f32 %v589, 0.03125
    %v592 = vadd.f32 %v590, 1e-12
    %v593 = vadd.f32 %v591, 1e-12
    %v594 = vrsqrt.pop %v592
    %v595 = vrsqrt.pop %v593
    %v596 = vmul.f32 %v582, %v594
    %v597 = vmul.f32 %v583, %v595
    %v599 = vlaneseq
    %v600 = vshrl.u32 %v599, 7
    %v601 = vsub.s32 0, %v600
    %v602 = vrot.slane %v572, %v601
    %v604 = vmul.f32 %v596, %v602
    %v605 = vmul.f32 %v597, %v602
    %v607 = vlaneseq
    %v608 = vshrl.u32 %v607, 7
    %v609 = vsub.s32 0, %v608
    %v610 = vrot.slane %v573, %v609
    %v612 = vadd.f32 %v604, %v610
    %v613 = vadd.f32 %v605, %v610
    %v614 = vld [vmem:[#allocation2 + $0x10] sm:$0xf]
    %v615 = vld [vmem:[#allocation2 + $0x48] sm:$0xf]
    %v616 = vld [vmem:[#allocation2 + $0x80] sm:$0xf]
    %v617 = vld [vmem:[#allocation2 + $0xb8] sm:$0xf]
    %v618 = vld [vmem:[#allocation2 + $0xf0] sm:$0xf]
    %v619 = vld [vmem:[#allocation2 + $0x128] sm:$0xf]
    %v620 = vld [vmem:[#allocation2 + $0x160] sm:$0xf]
    %v621 = vld [vmem:[#allocation2 + $0x198] sm:$0xf]
    %v622 = vld [vmem:[#allocation2 + $0x1d0] sm:$0xf]
    %v623 = vld [vmem:[#allocation2 + $0x208] sm:$0xf]
    %v624 = vld [vmem:[#allocation2 + $0x240] sm:$0xf]
    %v625 = vld [vmem:[#allocation2 + $0x278] sm:$0xf]
    %v626 = vld [vmem:[#allocation2 + $0x2b0] sm:$0xf]
    %v627 = vld [vmem:[#allocation2 + $0x2e8] sm:$0xf]
    %v628 = vld [vmem:[#allocation2 + $0x320] sm:$0xf]
    %v629 = vld [vmem:[#allocation2 + $0x358] sm:$0xf]
    %v630 = vpack.c.bf16 %v613, %v612
    %v631 = vld [vmem:[%s3 + $0x6] sm:$0x1]
    %v633 = vlaneseq
    %v634 = vshrl.u32 %v633, 7
    %v635 = vsub.s32 0, %v634
    %v636 = vrot.slane %v631, %v635
    %v654 = vunpack.c.l.b16 %v614
    %v655 = vunpack.c.l.b16 %v615
    %v656 = vunpack.c.l.b16 %v616
    %v657 = vunpack.c.l.b16 %v617
    %v658 = vunpack.c.l.b16 %v618
    %v659 = vunpack.c.l.b16 %v619
    %v660 = vunpack.c.l.b16 %v620
    %v661 = vunpack.c.l.b16 %v621
    %v662 = vunpack.c.l.b16 %v622
    %v663 = vunpack.c.l.b16 %v623
    %v664 = vunpack.c.l.b16 %v624
    %v665 = vunpack.c.l.b16 %v625
    %v666 = vunpack.c.l.b16 %v626
    %v667 = vunpack.c.l.b16 %v627
    %v668 = vunpack.c.l.b16 %v628
    %v669 = vunpack.c.l.b16 %v629
    %v670 = vpack.c.b16 %v655, %v654
    %v671 = vpack.c.b16 %v657, %v656
    %v672 = vpack.c.b16 %v659, %v658
    %v673 = vpack.c.b16 %v661, %v660
    %v674 = vpack.c.b16 %v663, %v662
    %v675 = vpack.c.b16 %v665, %v664
    %v676 = vpack.c.b16 %v667, %v666
    %v677 = vpack.c.b16 %v669, %v668
    %686 = vmatprep.subr.bf16.mxu0 0
    %687 = vmatpush1.bf16.msra.mxu0 %v670
    %688 = vmatprep.subr.bf16.mxu0 0
    %689 = vmatpush1.bf16.msra.mxu0 %v671
    %690 = vmatprep.subr.bf16.mxu0 0
    %691 = vmatpush1.bf16.msra.mxu0 %v672
    %692 = vmatprep.subr.bf16.mxu0 0
    %693 = vmatpush1.bf16.msra.mxu0 %v673
    %694 = vmatprep.subr.bf16.mxu0 0
    %695 = vmatpush1.bf16.msra.mxu0 %v674
    %696 = vmatprep.subr.bf16.mxu0 0
    %697 = vmatpush1.bf16.msra.mxu0 %v675
    %698 = vmatprep.subr.bf16.mxu0 0
    %699 = vmatpush1.bf16.msra.mxu0 %v676
    %700 = vmatprep.subr.bf16.mxu0 0
    %701 = vmatpush1.bf16.msra.mxu0 %v677
    %702 = vmatprep.subr.bf16.mxu0 0
    %703 = vmatpush1.bf16.msra.mxu0 0
    %704 = vmatprep.subr.bf16.mxu0 0
    %705 = vmatpush1.bf16.msra.mxu0 0
    %706 = vmatprep.subr.bf16.mxu0 0
    %707 = vmatpush1.bf16.msra.mxu0 0
    %708 = vmatprep.subr.bf16.mxu0 0
    %709 = vmatpush1.bf16.msra.mxu0 0
    %710 = vmatprep.subr.bf16.mxu0 0
    %711 = vmatpush1.bf16.msra.mxu0 0
    %712 = vmatprep.subr.bf16.mxu0 0
    %713 = vmatpush1.bf16.msra.mxu0 0
    %714 = vmatprep.subr.bf16.mxu0 0
    %715 = vmatpush1.bf16.msra.mxu0 0
    %716 = vmatprep.subr.bf16.mxu0 0
    %717 = vmatpush1.bf16.msra.mxu0 0
    %718 = vmatprep.mubr.bf16.mxu0 0
    %719 = vmatmul.mubr.bf16.gmra.mrb[0].mxu0 %v630
    %v720 = vpop.f32.mrb[0].mxu0
    %v721 = vadd.f32 %v636, %v720
    %v722 = vpop.f32.mrb[0].mxu0
    %v723 = vpop.f32.mrb[0].mxu0
    %v724 = vadd.f32 %v636, %v723
    %v725 = vpop.f32.mrb[0].mxu0
    %726 = vdwg.mxu0
    %v727 = vmul.f32 %v721, %v721
    %v728 = vmul.f32 %v724, %v724
    %v729 = vmul.f32 %v721, %v727
    %v730 = vmul.f32 %v724, %v728
    %v731 = vmul.f32 %v729, 0.044715
    %v732 = vmul.f32 %v730, 0.044715
    %v733 = vadd.f32 %v721, %v731
    %v734 = vadd.f32 %v724, %v732
    %v735 = vmul.f32 %v733, 0.7978846
    %v736 = vmul.f32 %v734, 0.7978846
    %v737 = vtanh.pop %v735
    %v738 = vtanh.pop %v736
    %v739 = vadd.f32 %v737, 1.0
    %v740 = vadd.f32 %v738, 1.0
    %v741 = vmul.f32 %v739, 0.5
    %v742 = vmul.f32 %v740, 0.5
    %v743 = vmul.f32 %v721, %v741
    %v744 = vmul.f32 %v724, %v742
    %v745 = vld [vmem:[#allocation2 + $0x14] sm:$0xf]
    %v746 = vld [vmem:[#allocation2 + $0x4c] sm:$0xf]
    %v747 = vld [vmem:[#allocation2 + $0x84] sm:$0xf]
    %v748 = vld [vmem:[#allocation2 + $0xbc] sm:$0xf]
    %v749 = vld [vmem:[#allocation2 + $0xf4] sm:$0xf]
    %v750 = vld [vmem:[#allocation2 + $0x12c] sm:$0xf]
    %v751 = vld [vmem:[#allocation2 + $0x164] sm:$0xf]
    %v752 = vld [vmem:[#allocation2 + $0x19c] sm:$0xf]
    %v753 = vld [vmem:[#allocation2 + $0x1d4] sm:$0xf]
    %v754 = vld [vmem:[#allocation2 + $0x20c] sm:$0xf]
    %v755 = vld [vmem:[#allocation2 + $0x244] sm:$0xf]
    %v756 = vld [vmem:[#allocation2 + $0x27c] sm:$0xf]
    %v757 = vld [vmem:[#allocation2 + $0x2b4] sm:$0xf]
    %v758 = vld [vmem:[#allocation2 + $0x2ec] sm:$0xf]
    %v759 = vld [vmem:[#allocation2 + $0x324] sm:$0xf]
    %v760 = vld [vmem:[#allocation2 + $0x35c] sm:$0xf]
    %v761 = vpack.c.bf16 %v744, %v743
    %v762 = vld [vmem:[%s3 + $0x7] sm:$0x1]
    %v764 = vlaneseq
    %v765 = vshrl.u32 %v764, 7
    %v766 = vsub.s32 0, %v765
    %v767 = vrot.slane %v762, %v766
    %v785 = vunpack.c.l.b16 %v745
    %v786 = vunpack.c.l.b16 %v746
    %v787 = vunpack.c.l.b16 %v747
    %v788 = vunpack.c.l.b16 %v748
    %v789 = vunpack.c.l.b16 %v749
    %v790 = vunpack.c.l.b16 %v750
    %v791 = vunpack.c.l.b16 %v751
    %v792 = vunpack.c.l.b16 %v752
    %v793 = vunpack.c.l.b16 %v753
    %v794 = vunpack.c.l.b16 %v754
    %v795 = vunpack.c.l.b16 %v755
    %v796 = vunpack.c.l.b16 %v756
    %v797 = vunpack.c.l.b16 %v757
    %v798 = vunpack.c.l.b16 %v758
    %v799 = vunpack.c.l.b16 %v759
    %v800 = vunpack.c.l.b16 %v760
    %v801 = vpack.c.b16 %v786, %v785
    %v802 = vpack.c.b16 %v788, %v787
    %v803 = vpack.c.b16 %v790, %v789
    %v804 = vpack.c.b16 %v792, %v791
    %v805 = vpack.c.b16 %v794, %v793
    %v806 = vpack.c.b16 %v796, %v795
    %v807 = vpack.c.b16 %v798, %v797
    %v808 = vpack.c.b16 %v800, %v799
    %817 = vmatprep.subr.bf16.mxu0 0
    %818 = vmatpush1.bf16.msra.mxu0 %v801
    %819 = vmatprep.subr.bf16.mxu0 0
    %820 = vmatpush1.bf16.msra.mxu0 %v802
    %821 = vmatprep.subr.bf16.mxu0 0
    %822 = vmatpush1.bf16.msra.mxu0 %v803
    %823 = vmatprep.subr.bf16.mxu0 0
    %824 = vmatpush1.bf16.msra.mxu0 %v804
    %825 = vmatprep.subr.bf16.mxu0 0
    %826 = vmatpush1.bf16.msra.mxu0 %v805
    %827 = vmatprep.subr.bf16.mxu0 0
    %828 = vmatpush1.bf16.msra.mxu0 %v806
    %829 = vmatprep.subr.bf16.mxu0 0
    %830 = vmatpush1.bf16.msra.mxu0 %v807
    %831 = vmatprep.subr.bf16.mxu0 0
    %832 = vmatpush1.bf16.msra.mxu0 %v808
    %833 = vmatprep.subr.bf16.mxu0 0
    %834 = vmatpush1.bf16.msra.mxu0 0
    %835 = vmatprep.subr.bf16.mxu0 0
    %836 = vmatpush1.bf16.msra.mxu0 0
    %837 = vmatprep.subr.bf16.mxu0 0
    %838 = vmatpush1.bf16.msra.mxu0 0
    %839 = vmatprep.subr.bf16.mxu0 0
    %840 = vmatpush1.bf16.msra.mxu0 0
    %841 = vmatprep.subr.bf16.mxu0 0
    %842 = vmatpush1.bf16.msra.mxu0 0
    %843 = vmatprep.subr.bf16.mxu0 0
    %844 = vmatpush1.bf16.msra.mxu0 0
    %845 = vmatprep.subr.bf16.mxu0 0
    %846 = vmatpush1.bf16.msra.mxu0 0
    %847 = vmatprep.subr.bf16.mxu0 0
    %848 = vmatpush1.bf16.msra.mxu0 0
    %849 = vmatprep.mubr.bf16.mxu0 0
    %850 = vmatmul.mubr.bf16.gmra.mrb[0].mxu0 %v761
    %v851 = vpop.f32.mrb[0].mxu0
    %v852 = vadd.f32 %v767, %v851
    %v853 = vpop.f32.mrb[0].mxu0
    %v854 = vpop.f32.mrb[0].mxu0
    %v855 = vadd.f32 %v767, %v854
    %v856 = vpop.f32.mrb[0].mxu0
    %857 = vdwg.mxu0
    %v858 = vadd.f32 %v612, %v852
    %v859 = vadd.f32 %v613, %v855
    %v860 = vld [vmem:[%s3 + $0x8] sm:$0x1]
    %v861 = vld [vmem:[%s3 + $0x9] sm:$0x1]
    %862 = vadd.xlane.f32.xlu0 %v858
    %v863 = vpop.xlane.xlu0 %862
    %864 = vadd.xlane.f32.xlu0 %v859
    %v865 = vpop.xlane.xlu0 %864
    %v866 = vmul.f32 %v863, 0.03125
    %v867 = vmul.f32 %v865, 0.03125
    %v868 = vsub.f32 %v858, %v866
    %v869 = vsub.f32 %v859, %v867
    %v870 = vmul.f32 %v868, %v36
    %v871 = vmul.f32 %v869, %v36
    %v872 = vmul.f32 %v870, %v870
    %v873 = vmul.f32 %v871, %v871
    %874 = vadd.xlane.f32.xlu0 %v872
    %v875 = vpop.xlane.xlu0 %874
    %876 = vadd.xlane.f32.xlu0 %v873
    %v877 = vpop.xlane.xlu0 %876
    %v878 = vmul.f32 %v875, 0.03125
    %v879 = vmul.f32 %v877, 0.03125
    %v880 = vadd.f32 %v878, 1e-12
    %v881 = vadd.f32 %v879, 1e-12
    %v882 = vrsqrt.pop %v880
    %v883 = vrsqrt.pop %v881
    %v884 = vmul.f32 %v870, %v882
    %v885 = vmul.f32 %v871, %v883
    %v887 = vlaneseq
    %v888 = vshrl.u32 %v887, 7
    %v889 = vsub.s32 0, %v888
    %v890 = vrot.slane %v860, %v889
    %v892 = vmul.f32 %v884, %v890
    %v893 = vmul.f32 %v885, %v890
    %v895 = vlaneseq
    %v896 = vshrl.u32 %v895, 7
    %v897 = vsub.s32 0, %v896
    %v898 = vrot.slane %v861, %v897
    %v900 = vadd.f32 %v892, %v898
    %v901 = vadd.f32 %v893, %v898
    %v902 = vld [vmem:[#allocation2 + $0x18] sm:$0xff]
    %v903 = vld [vmem:[#allocation2 + $0x20] sm:$0xf]
    %v904 = vld [vmem:[#allocation2 + $0x50] sm:$0xff]
    %v905 = vld [vmem:[#allocation2 + $0x58] sm:$0xf]
    %v906 = vld [vmem:[#allocation2 + $0x88] sm:$0xff]
    %v907 = vld [vmem:[#allocation2 + $0x90] sm:$0xf]
    %v908 = vld [vmem:[#allocation2 + $0xc0] sm:$0xff]
    %v909 = vld [vmem:[#allocation2 + $0xc8] sm:$0xf]
    %v910 = vld [vmem:[#allocation2 + $0xf8] sm:$0xff]
    %v911 = vld [vmem:[#allocation2 + $0x100] sm:$0xf]
    %v912 = vld [vmem:[#allocation2 + $0x130] sm:$0xff]
    %v913 = vld [vmem:[#allocation2 + $0x138] sm:$0xf]
    %v914 = vld [vmem:[#allocation2 + $0x168] sm:$0xff]
    %v915 = vld [vmem:[#allocation2 + $0x170] sm:$0xf]
    %v916 = vld [vmem:[#allocation2 + $0x1a0] sm:$0xff]
    %v917 = vld [vmem:[#allocation2 + $0x1a8] sm:$0xf]
    %v918 = vld [vmem:[#allocation2 + $0x1d8] sm:$0xff]
    %v919 = vld [vmem:[#allocation2 + $0x1e0] sm:$0xf]
    %v920 = vld [vmem:[#allocation2 + $0x210] sm:$0xff]
    %v921 = vld [vmem:[#allocation2 + $0x218] sm:$0xf]
    %v922 = vld [vmem:[#allocation2 + $0x248] sm:$0xff]
    %v923 = vld [vmem:[#allocation2 + $0x250] sm:$0xf]
    %v924 = vld [vmem:[#allocation2 + $0x280] sm:$0xff]
    %v925 = vld [vmem:[#allocation2 + $0x288] sm:$0xf]
    %v926 = vld [vmem:[#allocation2 + $0x2b8] sm:$0xff]
    %v927 = vld [vmem:[#allocation2 + $0x2c0] sm:$0xf]
    %v928 = vld [vmem:[#allocation2 + $0x2f0] sm:$0xff]
    %v929 = vld [vmem:[#allocation2 + $0x2f8] sm:$0xf]
    %v930 = vld [vmem:[#allocation2 + $0x328] sm:$0xff]
    %v931 = vld [vmem:[#allocation2 + $0x330] sm:$0xf]
    %v932 = vld [vmem:[#allocation2 + $0x360] sm:$0xff]
    %v933 = vld [vmem:[#allocation2 + $0x368] sm:$0xf]
    %v934 = vpack.c.bf16 %v901, %v900
    %v935 = vld [vmem:[%s3 + $0xa] sm:$0x7]
    %v937 = vlaneseq
    %v938 = vshrl.u32 %v937, 7
    %v939 = vsub.s32 0, %v938
    %v940 = vrot.slane %v935, %v939
    %v941 = vlaneseq
    %v942 = vshrl.u32 %v941, 7
    %v943 = vsub.s32 1, %v942
    %v944 = vrot.slane %v935, %v943
    %v945 = vlaneseq
    %v946 = vshrl.u32 %v945, 7
    %v947 = vsub.s32 2, %v946
    %v948 = vrot.slane %v935, %v947
    %v984 = vunpack.c.l.b16 %v902
    %v985 = vunpack.c.h.b16 %v902
    %v986 = vunpack.c.l.b16 %v903
    %v987 = vunpack.c.l.b16 %v904
    %v988 = vunpack.c.h.b16 %v904
    %v989 = vunpack.c.l.b16 %v905
    %v990 = vunpack.c.l.b16 %v906
    %v991 = vunpack.c.h.b16 %v906
    %v992 = vunpack.c.l.b16 %v907
    %v993 = vunpack.c.l.b16 %v908
    %v994 = vunpack.c.h.b16 %v908
    %v995 = vunpack.c.l.b16 %v909
    %v996 = vunpack.c.l.b16 %v910
    %v997 = vunpack.c.h.b16 %v910
    %v998 = vunpack.c.l.b16 %v911
    %v999 = vunpack.c.l.b16 %v912
    %v1000 = vunpack.c.h.b16 %v912
    %v1001 = vunpack.c.l.b16 %v913
    %v1002 = vunpack.c.l.b16 %v914
    %v1003 = vunpack.c.h.b16 %v914
    %v1004 = vunpack.c.l.b16 %v915
    %v1005 = vunpack.c.l.b16 %v916
    %v1006 = vunpack.c.h.b16 %v916
    %v1007 = vunpack.c.l.b16 %v917
    %v1008 = vunpack.c.l.b16 %v918
    %v1009 = vunpack.c.h.b16 %v918
    %v1010 = vunpack.c.l.b16 %v919
    %v1011 = vunpack.c.l.b16 %v920
    %v1012 = vunpack.c.h.b16 %v920
    %v1013 = vunpack.c.l.b16 %v921
    %v1014 = vunpack.c.l.b16 %v922
    %v1015 = vunpack.c.h.b16 %v922
    %v1016 = vunpack.c.l.b16 %v923
    %v1017 = vunpack.c.l.b16 %v924
    %v1018 = vunpack.c.h.b16 %v924
    %v1019 = vunpack.c.l.b16 %v925
    %v1020 = vunpack.c.l.b16 %v926
    %v1021 = vunpack.c.h.b16 %v926
    %v1022 = vunpack.c.l.b16 %v927
    %v1023 = vunpack.c.l.b16 %v928
    %v1024 = vunpack.c.h.b16 %v928
    %v1025 = vunpack.c.l.b16 %v929
    %v1026 = vunpack.c.l.b16 %v930
    %v1027 = vunpack.c.h.b16 %v930
    %v1028 = vunpack.c.l.b16 %v931
    %v1029 = vunpack.c.l.b16 %v932
    %v1030 = vunpack.c.h.b16 %v932
    %v1031 = vunpack.c.l.b16 %v933
    %v1032 = vpack.c.b16 %v987, %v984
    %v1033 = vpack.c.b16 %v988, %v985
    %v1034 = vpack.c.b16 %v989, %v986
    %v1035 = vpack.c.b16 %v993, %v990
    %v1036 = vpack.c.b16 %v994, %v991
    %v1037 = vpack.c.b16 %v995, %v992
    %v1038 = vpack.c.b16 %v999, %v996
    %v1039 = vpack.c.b16 %v1000, %v997
    %v1040 = vpack.c.b16 %v1001, %v998
    %v1041 = vpack.c.b16 %v1005, %v1002
    %v1042 = vpack.c.b16 %v1006, %v1003
    %v1043 = vpack.c.b16 %v1007, %v1004
    %v1044 = vpack.c.b16 %v1011, %v1008
    %v1045 = vpack.c.b16 %v1012, %v1009
    %v1046 = vpack.c.b16 %v1013, %v1010
    %v1047 = vpack.c.b16 %v1017, %v1014
    %v1048 = vpack.c.b16 %v1018, %v1015
    %v1049 = vpack.c.b16 %v1019, %v1016
    %v1050 = vpack.c.b16 %v1023, %v1020
    %v1051 = vpack.c.b16 %v1024, %v1021
    %v1052 = vpack.c.b16 %v1025, %v1022
    %v1053 = vpack.c.b16 %v1029, %v1026
    %v1054 = vpack.c.b16 %v1030, %v1027
    %v1055 = vpack.c.b16 %v1031, %v1028
    %1080 = vmatprep.subr.bf16.mxu0 %v1033
    %1081 = vmatpush1.bf16.msra.mxu0 %v1032
    %1082 = vmatprep.subr.bf16.mxu0 %v1036
    %1083 = vmatpush1.bf16.msra.mxu0 %v1035
    %1084 = vmatprep.subr.bf16.mxu0 %v1039
    %1085 = vmatpush1.bf16.msra.mxu0 %v1038
    %1086 = vmatprep.subr.bf16.mxu0 %v1042
    %1087 = vmatpush1.bf16.msra.mxu0 %v1041
    %1088 = vmatprep.subr.bf16.mxu0 %v1045
    %1089 = vmatpush1.bf16.msra.mxu0 %v1044
    %1090 = vmatprep.subr.bf16.mxu0 %v1048
    %1091 = vmatpush1.bf16.msra.mxu0 %v1047
    %1092 = vmatprep.subr.bf16.mxu0 %v1051
    %1093 = vmatpush1.bf16.msra.mxu0 %v1050
    %1094 = vmatprep.subr.bf16.mxu0 %v1054
    %1095 = vmatpush1.bf16.msra.mxu0 %v1053
    %1096 = vmatprep.subr.bf16.mxu0 0
    %1097 = vmatpush1.bf16.msra.mxu0 0
    %1098 = vmatprep.subr.bf16.mxu0 0
    %1099 = vmatpush1.bf16.msra.mxu0 0
    %1100 = vmatprep.subr.bf16.mxu0 0
    %1101 = vmatpush1.bf16.msra.mxu0 0
    %1102 = vmatprep.subr.bf16.mxu0 0
    %1103 = vmatpush1.bf16.msra.mxu0 0
    %1104 = vmatprep.subr.bf16.mxu0 0
    %1105 = vmatpush1.bf16.msra.mxu0 0
    %1106 = vmatprep.subr.bf16.mxu0 0
    %1107 = vmatpush1.bf16.msra.mxu0 0
    %1108 = vmatprep.subr.bf16.mxu0 0
    %1109 = vmatpush1.bf16.msra.mxu0 0
    %1110 = vmatprep.subr.bf16.mxu0 0
    %1111 = vmatpush1.bf16.msra.mxu0 0
    %1112 = vmatprep.mubr.bf16.mxu0 0
    %1113 = vmatmul.mubr.bf16.gmra.mrb[0].mxu0 %v934
    %v1114 = vpop.f32.mrb[0].mxu0
    %v1115 = vadd.f32 %v940, %v1114
    %v1116 = vpop.f32.mrb[0].mxu0
    %v1117 = vadd.f32 %v944, %v1116
    %v1118 = vpop.f32.mrb[0].mxu0
    %v1119 = vadd.f32 %v940, %v1118
    %v1120 = vpop.f32.mrb[0].mxu0
    %v1121 = vadd.f32 %v944, %v1120
    %1122 = vdwg.mxu0
    %1123 = vmatprep.subr.bf16.mxu0 0
    %1124 = vmatpush1.bf16.msra.mxu0 %v1034
    %1125 = vmatprep.subr.bf16.mxu0 0
    %1126 = vmatpush1.bf16.msra.mxu0 %v1037
    %1127 = vmatprep.subr.bf16.mxu0 0
    %1128 = vmatpush1.bf16.msra.mxu0 %v1040
    %1129 = vmatprep.subr.bf16.mxu0 0
    %1130 = vmatpush1.bf16.msra.mxu0 %v1043
    %1131 = vmatprep.subr.bf16.mxu0 0
    %1132 = vmatpush1.bf16.msra.mxu0 %v1046
    %1133 = vmatprep.subr.bf16.mxu0 0
    %1134 = vmatpush1.bf16.msra.mxu0 %v1049
    %1135 = vmatprep.subr.bf16.mxu0 0
    %1136 = vmatpush1.bf16.msra.mxu0 %v1052
    %1137 = vmatprep.subr.bf16.mxu0 0
    %1138 = vmatpush1.bf16.msra.mxu0 %v1055
    %1139 = vmatprep.subr.bf16.mxu0 0
    %1140 = vmatpush1.bf16.msra.mxu0 0
    %1141 = vmatprep.subr.bf16.mxu0 0
    %1142 = vmatpush1.bf16.msra.mxu0 0
    %1143 = vmatprep.subr.bf16.mxu0 0
    %1144 = vmatpush1.bf16.msra.mxu0 0
    %1145 = vmatprep.subr.bf16.mxu0 0
    %1146 = vmatpush1.bf16.msra.mxu0 0
    %1147 = vmatprep.subr.bf16.mxu0 0
    %1148 = vmatpush1.bf16.msra.mxu0 0
    %1149 = vmatprep.subr.bf16.mxu0 0
    %1150 = vmatpush1.bf16.msra.mxu0 0
    %1151 = vmatprep.subr.bf16.mxu0 0
    %1152 = vmatpush1.bf16.msra.mxu0 0
    %1153 = vmatprep.subr.bf16.mxu0 0
    %1154 = vmatpush1.bf16.msra.mxu0 0
    %1155 = vmatprep.mubr.bf16.mxu0 0
    %1156 = vmatmul.mubr.bf16.gmra.mrb[0].mxu0 %v934
    %v1157 = vpop.f32.mrb[0].mxu0
    %v1158 = vadd.f32 %v948, %v1157
    %v1159 = vpop.f32.mrb[0].mxu0
    %v1160 = vpop.f32.mrb[0].mxu0
    %v1161 = vadd.f32 %v948, %v1160
    %v1162 = vpop.f32.mrb[0].mxu0
    %1163 = vdwg.mxu0
    %v1164 = vpack.c.bf16 %v1119, %v1115
    %v1165 = vpack.c.bf16 %v1121, %v1117
    %1166 = vmatprep.subr.bf16.mxu0 0
    %1167 = vmatpush1.bf16.xpose.msra.mxu0 %v1165
    %1168 = vmatprep.subr.bf16.mxu0 0
    %1169 = vmatpush1.bf16.xpose.msra.mxu0 0
    %1170 = vmatprep.subr.bf16.mxu0 0
    %1171 = vmatpush1.bf16.xpose.msra.mxu0 0
    %1172 = vmatprep.subr.bf16.mxu0 0
    %1173 = vmatpush1.bf16.xpose.msra.mxu0 0
    %1174 = vmatprep.subr.bf16.mxu0 0
    %1175 = vmatpush1.bf16.xpose.msra.mxu0 0
    %1176 = vmatprep.subr.bf16.mxu0 0
    %1177 = vmatpush1.bf16.xpose.msra.mxu0 0
    %1178 = vmatprep.subr.bf16.mxu0 0
    %1179 = vmatpush1.bf16.xpose.msra.mxu0 0
    %1180 = vmatprep.subr.bf16.mxu0 0
    %1181 = vmatpush1.bf16.xpose.msra.mxu0 0
    %1182 = vmatprep.subr.bf16.mxu0 0
    %1183 = vmatpush1.bf16.xpose.msra.mxu0 0
    %1184 = vmatprep.subr.bf16.mxu0 0
    %1185 = vmatpush1.bf16.xpose.msra.mxu0 0
    %1186 = vmatprep.subr.bf16.mxu0 0
    %1187 = vmatpush1.bf16.xpose.msra.mxu0 0
    %1188 = vmatprep.subr.bf16.mxu0 0
    %1189 = vmatpush1.bf16.xpose.msra.mxu0 0
    %1190 = vmatprep.subr.bf16.mxu0 0
    %1191 = vmatpush1.bf16.xpose.msra.mxu0 0
    %1192 = vmatprep.subr.bf16.mxu0 0
    %1193 = vmatpush1.bf16.xpose.msra.mxu0 0
    %1194 = vmatprep.subr.bf16.mxu0 0
    %1195 = vmatpush1.bf16.xpose.msra.mxu0 0
    %1196 = vmatprep.subr.bf16.mxu0 0
    %1197 = vmatpush1.bf16.xpose.msra.mxu0 0
    %1198 = vmatprep.mubr.bf16.mxu0 0
    %1199 = vmatmul.mubr.bf16.gmra.mrb[0].mxu0 %v1164
    %v1200 = vpop.f32.mrb[0].mxu0
    %v1201 = vadd.f32 %v81, %v1200
    %v1202 = vpop.f32.mrb[0].mxu0
    %v1203 = vpop.f32.mrb[0].mxu0
    %v1204 = vadd.f32 %v82, %v1203
    %v1205 = vpop.f32.mrb[0].mxu0
    %1206 = vdwg.mxu0
    %v1207 = vsel %vm388, %v1201, -inf
    %1208 = vmax.xlane.f32.xlu0 %v1207
    %v1209 = vpop.xlane.xlu0 %1208
    %v1210 = vsel %vm388, %v1204, -inf
    %1211 = vmax.xlane.f32.xlu0 %v1210
    %v1212 = vpop.xlane.xlu0 %1211
    %v1213 = vsub.f32 %v1201, %v1209
    %v1214 = vsub.f32 %v1204, %v1212
    %v1215 = vmul.f32 %v1213, 1.442695
    %v1216 = vpow.pop %v1215
    %v1217 = vmul.f32 %v1214, 1.442695
    %v1218 = vpow.pop %v1217
    %v1219 = vsel %vm388, %v1216, 0.0
    %1220 = vadd.xlane.f32.xlu0 %v1219
    %v1221 = vpop.xlane.xlu0 %1220
    %v1222 = vsel %vm388, %v1218, 0.0
    %1223 = vadd.xlane.f32.xlu0 %v1222
    %v1224 = vpop.xlane.xlu0 %1223
    %v1225 = vrcp.pop %v1221
    %v1226 = vrcp.pop %v1224
    %v1227 = vmul.f32 %v1216, %v1225
    %v1228 = vmul.f32 %v1218, %v1226
    %v1229 = vpack.c.bf16 %v1228, %v1227
    %v1230 = vpack.c.bf16 %v1161, %v1158
    %v1232 = vsel %vm388, %v1229, 0
    %1234 = vmatprep.subr.bf16.mxu0 0
    %1235 = vmatpush1.bf16.msra.mxu0 %v1230
    %1236 = vmatprep.subr.bf16.mxu0 0
    %1237 = vmatpush1.bf16.msra.mxu0 0
    %1238 = vmatprep.subr.bf16.mxu0 0
    %1239 = vmatpush1.bf16.msra.mxu0 0
    %1240 = vmatprep.subr.bf16.mxu0 0
    %1241 = vmatpush1.bf16.msra.mxu0 0
    %1242 = vmatprep.subr.bf16.mxu0 0
    %1243 = vmatpush1.bf16.msra.mxu0 0
    %1244 = vmatprep.subr.bf16.mxu0 0
    %1245 = vmatpush1.bf16.msra.mxu0 0
    %1246 = vmatprep.subr.bf16.mxu0 0
    %1247 = vmatpush1.bf16.msra.mxu0 0
    %1248 = vmatprep.subr.bf16.mxu0 0
    %1249 = vmatpush1.bf16.msra.mxu0 0
    %1250 = vmatprep.subr.bf16.mxu0 0
    %1251 = vmatpush1.bf16.msra.mxu0 0
    %1252 = vmatprep.subr.bf16.mxu0 0
    %1253 = vmatpush1.bf16.msra.mxu0 0
    %1254 = vmatprep.subr.bf16.mxu0 0
    %1255 = vmatpush1.bf16.msra.mxu0 0
    %1256 = vmatprep.subr.bf16.mxu0 0
    %1257 = vmatpush1.bf16.msra.mxu0 0
    %1258 = vmatprep.subr.bf16.mxu0 0
    %1259 = vmatpush1.bf16.msra.mxu0 0
    %1260 = vmatprep.subr.bf16.mxu0 0
    %1261 = vmatpush1.bf16.msra.mxu0 0
    %1262 = vmatprep.subr.bf16.mxu0 0
    %1263 = vmatpush1.bf16.msra.mxu0 0
    %1264 = vmatprep.subr.bf16.mxu0 0
    %1265 = vmatpush1.bf16.msra.mxu0 0
    %1266 = vmatprep.mubr.bf16.mxu0 0
    %1267 = vmatmul.mubr.bf16.gmra.mrb[0].mxu0 %v1232
    %v1268 = vpop.f32.mrb[0].mxu0
    %v1269 = vadd.f32 0.0, %v1268
    %v1270 = vpop.f32.mrb[0].mxu0
    %v1271 = vpop.f32.mrb[0].mxu0
    %v1272 = vadd.f32 0.0, %v1271
    %v1273 = vpop.f32.mrb[0].mxu0
    %1274 = vdwg.mxu0
    %v1275 = vld [vmem:[#allocation2 + $0x24] sm:$0xf]
    %v1276 = vld [vmem:[#allocation2 + $0x5c] sm:$0xf]
    %v1277 = vld [vmem:[#allocation2 + $0x94] sm:$0xf]
    %v1278 = vld [vmem:[#allocation2 + $0xcc] sm:$0xf]
    %v1279 = vld [vmem:[#allocation2 + $0x104] sm:$0xf]
    %v1280 = vld [vmem:[#allocation2 + $0x13c] sm:$0xf]
    %v1281 = vld [vmem:[#allocation2 + $0x174] sm:$0xf]
    %v1282 = vld [vmem:[#allocation2 + $0x1ac] sm:$0xf]
    %v1283 = vld [vmem:[#allocation2 + $0x1e4] sm:$0xf]
    %v1284 = vld [vmem:[#allocation2 + $0x21c] sm:$0xf]
    %v1285 = vld [vmem:[#allocation2 + $0x254] sm:$0xf]
    %v1286 = vld [vmem:[#allocation2 + $0x28c] sm:$0xf]
    %v1287 = vld [vmem:[#allocation2 + $0x2c4] sm:$0xf]
    %v1288 = vld [vmem:[#allocation2 + $0x2fc] sm:$0xf]
    %v1289 = vld [vmem:[#allocation2 + $0x334] sm:$0xf]
    %v1290 = vld [vmem:[#allocation2 + $0x36c] sm:$0xf]
    %v1291 = vpack.c.bf16 %v1272, %v1269
    %v1292 = vld [vmem:[%s3 + $0xd] sm:$0x1]
    %v1294 = vlaneseq
    %v1295 = vshrl.u32 %v1294, 7
    %v1296 = vsub.s32 0, %v1295
    %v1297 = vrot.slane %v1292, %v1296
    %v1315 = vunpack.c.l.b16 %v1275
    %v1316 = vunpack.c.l.b16 %v1276
    %v1317 = vunpack.c.l.b16 %v1277
    %v1318 = vunpack.c.l.b16 %v1278
    %v1319 = vunpack.c.l.b16 %v1279
    %v1320 = vunpack.c.l.b16 %v1280
    %v1321 = vunpack.c.l.b16 %v1281
    %v1322 = vunpack.c.l.b16 %v1282
    %v1323 = vunpack.c.l.b16 %v1283
    %v1324 = vunpack.c.l.b16 %v1284
    %v1325 = vunpack.c.l.b16 %v1285
    %v1326 = vunpack.c.l.b16 %v1286
    %v1327 = vunpack.c.l.b16 %v1287
    %v1328 = vunpack.c.l.b16 %v1288
    %v1329 = vunpack.c.l.b16 %v1289
    %v1330 = vunpack.c.l.b16 %v1290
    %v1331 = vpack.c.b16 %v1316, %v1315
    %v1332 = vpack.c.b16 %v1318, %v1317
    %v1333 = vpack.c.b16 %v1320, %v1319
    %v1334 = vpack.c.b16 %v1322, %v1321
    %v1335 = vpack.c.b16 %v1324, %v1323
    %v1336 = vpack.c.b16 %v1326, %v1325
    %v1337 = vpack.c.b16 %v1328, %v1327
    %v1338 = vpack.c.b16 %v1330, %v1329
    %1347 = vmatprep.subr.bf16.mxu0 0
    %1348 = vmatpush1.bf16.msra.mxu0 %v1331
    %1349 = vmatprep.subr.bf16.mxu0 0
    %1350 = vmatpush1.bf16.msra.mxu0 %v1332
    %1351 = vmatprep.subr.bf16.mxu0 0
    %1352 = vmatpush1.bf16.msra.mxu0 %v1333
    %1353 = vmatprep.subr.bf16.mxu0 0
    %1354 = vmatpush1.bf16.msra.mxu0 %v1334
    %1355 = vmatprep.subr.bf16.mxu0 0
    %1356 = vmatpush1.bf16.msra.mxu0 %v1335
    %1357 = vmatprep.subr.bf16.mxu0 0
    %1358 = vmatpush1.bf16.msra.mxu0 %v1336
    %1359 = vmatprep.subr.bf16.mxu0 0
    %1360 = vmatpush1.bf16.msra.mxu0 %v1337
    %1361 = vmatprep.subr.bf16.mxu0 0
    %1362 = vmatpush1.bf16.msra.mxu0 %v1338
    %1363 = vmatprep.subr.bf16.mxu0 0
    %1364 = vmatpush1.bf16.msra.mxu0 0
    %1365 = vmatprep.subr.bf16.mxu0 0
    %1366 = vmatpush1.bf16.msra.mxu0 0
    %1367 = vmatprep.subr.bf16.mxu0 0
    %1368 = vmatpush1.bf16.msra.mxu0 0
    %1369 = vmatprep.subr.bf16.mxu0 0
    %1370 = vmatpush1.bf16.msra.mxu0 0
    %1371 = vmatprep.subr.bf16.mxu0 0
    %1372 = vmatpush1.bf16.msra.mxu0 0
    %1373 = vmatprep.subr.bf16.mxu0 0
    %1374 = vmatpush1.bf16.msra.mxu0 0
    %1375 = vmatprep.subr.bf16.mxu0 0
    %1376 = vmatpush1.bf16.msra.mxu0 0
    %1377 = vmatprep.subr.bf16.mxu0 0
    %1378 = vmatpush1.bf16.msra.mxu0 0
    %1379 = vmatprep.mubr.bf16.mxu0 0
    %1380 = vmatmul.mubr.bf16.gmra.mrb[0].mxu0 %v1291
    %v1381 = vpop.f32.mrb[0].mxu0
    %v1382 = vadd.f32 %v1297, %v1381
    %v1383 = vpop.f32.mrb[0].mxu0
    %v1384 = vpop.f32.mrb[0].mxu0
    %v1385 = vadd.f32 %v1297, %v1384
    %v1386 = vpop.f32.mrb[0].mxu0
    %1387 = vdwg.mxu0
    %v1388 = vadd.f32 %v900, %v1382
    %v1389 = vadd.f32 %v901, %v1385
    %v1390 = vld [vmem:[%s3 + $0xe] sm:$0x1]
    %v1391 = vld [vmem:[%s3 + $0xf] sm:$0x1]
    %1392 = vadd.xlane.f32.xlu0 %v1388
    %v1393 = vpop.xlane.xlu0 %1392
    %1394 = vadd.xlane.f32.xlu0 %v1389
    %v1395 = vpop.xlane.xlu0 %1394
    %v1396 = vmul.f32 %v1393, 0.03125
    %v1397 = vmul.f32 %v1395, 0.03125
    %v1398 = vsub.f32 %v1388, %v1396
    %v1399 = vsub.f32 %v1389, %v1397
    %v1400 = vmul.f32 %v1398, %v36
    %v1401 = vmul.f32 %v1399, %v36
    %v1402 = vmul.f32 %v1400, %v1400
    %v1403 = vmul.f32 %v1401, %v1401
    %1404 = vadd.xlane.f32.xlu0 %v1402
    %v1405 = vpop.xlane.xlu0 %1404
    %1406 = vadd.xlane.f32.xlu0 %v1403
    %v1407 = vpop.xlane.xlu0 %1406
    %v1408 = vmul.f32 %v1405, 0.03125
    %v1409 = vmul.f32 %v1407, 0.03125
    %v1410 = vadd.f32 %v1408, 1e-12
    %v1411 = vadd.f32 %v1409, 1e-12
    %v1412 = vrsqrt.pop %v1410
    %v1413 = vrsqrt.pop %v1411
    %v1414 = vmul.f32 %v1400, %v1412
    %v1415 = vmul.f32 %v1401, %v1413
    %v1417 = vlaneseq
    %v1418 = vshrl.u32 %v1417, 7
    %v1419 = vsub.s32 0, %v1418
    %v1420 = vrot.slane %v1390, %v1419
    %v1422 = vmul.f32 %v1414, %v1420
    %v1423 = vmul.f32 %v1415, %v1420
    %v1425 = vlaneseq
    %v1426 = vshrl.u32 %v1425, 7
    %v1427 = vsub.s32 0, %v1426
    %v1428 = vrot.slane %v1391, %v1427
    %v1430 = vadd.f32 %v1422, %v1428
    %v1431 = vadd.f32 %v1423, %v1428
    %v1432 = vld [vmem:[#allocation2 + $0x28] sm:$0xf]
    %v1433 = vld [vmem:[#allocation2 + $0x60] sm:$0xf]
    %v1434 = vld [vmem:[#allocation2 + $0x98] sm:$0xf]
    %v1435 = vld [vmem:[#allocation2 + $0xd0] sm:$0xf]
    %v1436 = vld [vmem:[#allocation2 + $0x108] sm:$0xf]
    %v1437 = vld [vmem:[#allocation2 + $0x140] sm:$0xf]
    %v1438 = vld [vmem:[#allocation2 + $0x178] sm:$0xf]
    %v1439 = vld [vmem:[#allocation2 + $0x1b0] sm:$0xf]
    %v1440 = vld [vmem:[#allocation2 + $0x1e8] sm:$0xf]
    %v1441 = vld [vmem:[#allocation2 + $0x220] sm:$0xf]
    %v1442 = vld [vmem:[#allocation2 + $0x258] sm:$0xf]
    %v1443 = vld [vmem:[#allocation2 + $0x290] sm:$0xf]
    %v1444 = vld [vmem:[#allocation2 + $0x2c8] sm:$0xf]
    %v1445 = vld [vmem:[#allocation2 + $0x300] sm:$0xf]
    %v1446 = vld [vmem:[#allocation2 + $0x338] sm:$0xf]
    %v1447 = vld [vmem:[#allocation2 + $0x370] sm:$0xf]
    %v1448 = vpack.c.bf16 %v1431, %v1430
    %v1449 = vld [vmem:[%s3 + $0x10] sm:$0x1]
    %v1451 = vlaneseq
    %v1452 = vshrl.u32 %v1451, 7
    %v1453 = vsub.s32 0, %v1452
    %v1454 = vrot.slane %v1449, %v1453
    %v1472 = vunpack.c.l.b16 %v1432
    %v1473 = vunpack.c.l.b16 %v1433
    %v1474 = vunpack.c.l.b16 %v1434
    %v1475 = vunpack.c.l.b16 %v1435
    %v1476 = vunpack.c.l.b16 %v1436
    %v1477 = vunpack.c.l.b16 %v1437
    %v1478 = vunpack.c.l.b16 %v1438
    %v1479 = vunpack.c.l.b16 %v1439
    %v1480 = vunpack.c.l.b16 %v1440
    %v1481 = vunpack.c.l.b16 %v1441
    %v1482 = vunpack.c.l.b16 %v1442
    %v1483 = vunpack.c.l.b16 %v1443
    %v1484 = vunpack.c.l.b16 %v1444
    %v1485 = vunpack.c.l.b16 %v1445
    %v1486 = vunpack.c.l.b16 %v1446
    %v1487 = vunpack.c.l.b16 %v1447
    %v1488 = vpack.c.b16 %v1473, %v1472
    %v1489 = vpack.c.b16 %v1475, %v1474
    %v1490 = vpack.c.b16 %v1477, %v1476
    %v1491 = vpack.c.b16 %v1479, %v1478
    %v1492 = vpack.c.b16 %v1481, %v1480
    %v1493 = vpack.c.b16 %v1483, %v1482
    %v1494 = vpack.c.b16 %v1485, %v1484
    %v1495 = vpack.c.b16 %v1487, %v1486
    %1504 = vmatprep.subr.bf16.mxu0 0
    %1505 = vmatpush1.bf16.msra.mxu0 %v1488
    %1506 = vmatprep.subr.bf16.mxu0 0
    %1507 = vmatpush1.bf16.msra.mxu0 %v1489
    %1508 = vmatprep.subr.bf16.mxu0 0
    %1509 = vmatpush1.bf16.msra.mxu0 %v1490
    %1510 = vmatprep.subr.bf16.mxu0 0
    %1511 = vmatpush1.bf16.msra.mxu0 %v1491
    %1512 = vmatprep.subr.bf16.mxu0 0
    %1513 = vmatpush1.bf16.msra.mxu0 %v1492
    %1514 = vmatprep.subr.bf16.mxu0 0
    %1515 = vmatpush1.bf16.msra.mxu0 %v1493
    %1516 = vmatprep.subr.bf16.mxu0 0
    %1517 = vmatpush1.bf16.msra.mxu0 %v1494
    %1518 = vmatprep.subr.bf16.mxu0 0
    %1519 = vmatpush1.bf16.msra.mxu0 %v1495
    %1520 = vmatprep.subr.bf16.mxu0 0
    %1521 = vmatpush1.bf16.msra.mxu0 0
    %1522 = vmatprep.subr.bf16.mxu0 0
    %1523 = vmatpush1.bf16.msra.mxu0 0
    %1524 = vmatprep.subr.bf16.mxu0 0
    %1525 = vmatpush1.bf16.msra.mxu0 0
    %1526 = vmatprep.subr.bf16.mxu0 0
    %1527 = vmatpush1.bf16.msra.mxu0 0
    %1528 = vmatprep.subr.bf16.mxu0 0
    %1529 = vmatpush1.bf16.msra.mxu0 0
    %1530 = vmatprep.subr.bf16.mxu0 0
    %1531 = vmatpush1.bf16.msra.mxu0 0
    %1532 = vmatprep.subr.bf16.mxu0 0
    %1533 = vmatpush1.bf16.msra.mxu0 0
    %1534 = vmatprep.subr.bf16.mxu0 0
    %1535 = vmatpush1.bf16.msra.mxu0 0
    %1536 = vmatprep.mubr.bf16.mxu0 0
    %1537 = vmatmul.mubr.bf16.gmra.mrb[0].mxu0 %v1448
    %v1538 = vpop.f32.mrb[0].mxu0
    %v1539 = vadd.f32 %v1454, %v1538
    %v1540 = vpop.f32.mrb[0].mxu0
    %v1541 = vpop.f32.mrb[0].mxu0
    %v1542 = vadd.f32 %v1454, %v1541
    %v1543 = vpop.f32.mrb[0].mxu0
    %1544 = vdwg.mxu0
    %v1545 = vmul.f32 %v1539, %v1539
    %v1546 = vmul.f32 %v1542, %v1542
    %v1547 = vmul.f32 %v1539, %v1545
    %v1548 = vmul.f32 %v1542, %v1546
    %v1549 = vmul.f32 %v1547, 0.044715
    %v1550 = vmul.f32 %v1548, 0.044715
    %v1551 = vadd.f32 %v1539, %v1549
    %v1552 = vadd.f32 %v1542, %v1550
    %v1553 = vmul.f32 %v1551, 0.7978846
    %v1554 = vmul.f32 %v1552, 0.7978846
    %v1555 = vtanh.pop %v1553
    %v1556 = vtanh.pop %v1554
    %v1557 = vadd.f32 %v1555, 1.0
    %v1558 = vadd.f32 %v1556, 1.0
    %v1559 = vmul.f32 %v1557, 0.5
    %v1560 = vmul.f32 %v1558, 0.5
    %v1561 = vmul.f32 %v1539, %v1559
    %v1562 = vmul.f32 %v1542, %v1560
    %v1563 = vld [vmem:[#allocation2 + $0x2c] sm:$0xf]
    %v1564 = vld [vmem:[#allocation2 + $0x64] sm:$0xf]
    %v1565 = vld [vmem:[#allocation2 + $0x9c] sm:$0xf]
    %v1566 = vld [vmem:[#allocation2 + $0xd4] sm:$0xf]
    %v1567 = vld [vmem:[#allocation2 + $0x10c] sm:$0xf]
    %v1568 = vld [vmem:[#allocation2 + $0x144] sm:$0xf]
    %v1569 = vld [vmem:[#allocation2 + $0x17c] sm:$0xf]
    %v1570 = vld [vmem:[#allocation2 + $0x1b4] sm:$0xf]
    %v1571 = vld [vmem:[#allocation2 + $0x1ec] sm:$0xf]
    %v1572 = vld [vmem:[#allocation2 + $0x224] sm:$0xf]
    %v1573 = vld [vmem:[#allocation2 + $0x25c] sm:$0xf]
    %v1574 = vld [vmem:[#allocation2 + $0x294] sm:$0xf]
    %v1575 = vld [vmem:[#allocation2 + $0x2cc] sm:$0xf]
    %v1576 = vld [vmem:[#allocation2 + $0x304] sm:$0xf]
    %v1577 = vld [vmem:[#allocation2 + $0x33c] sm:$0xf]
    %v1578 = vld [vmem:[#allocation2 + $0x374] sm:$0xf]
    %v1579 = vpack.c.bf16 %v1562, %v1561
    %v1580 = vld [vmem:[%s3 + $0x11] sm:$0x1]
    %v1582 = vlaneseq
    %v1583 = vshrl.u32 %v1582, 7
    %v1584 = vsub.s32 0, %v1583
    %v1585 = vrot.slane %v1580, %v1584
    %v1603 = vunpack.c.l.b16 %v1563
    %v1604 = vunpack.c.l.b16 %v1564
    %v1605 = vunpack.c.l.b16 %v1565
    %v1606 = vunpack.c.l.b16 %v1566
    %v1607 = vunpack.c.l.b16 %v1567
    %v1608 = vunpack.c.l.b16 %v1568
    %v1609 = vunpack.c.l.b16 %v1569
    %v1610 = vunpack.c.l.b16 %v1570
    %v1611 = vunpack.c.l.b16 %v1571
    %v1612 = vunpack.c.l.b16 %v1572
    %v1613 = vunpack.c.l.b16 %v1573
    %v1614 = vunpack.c.l.b16 %v1574
    %v1615 = vunpack.c.l.b16 %v1575
    %v1616 = vunpack.c.l.b16 %v1576
    %v1617 = vunpack.c.l.b16 %v1577
    %v1618 = vunpack.c.l.b16 %v1578
    %v1619 = vpack.c.b16 %v1604, %v1603
    %v1620 = vpack.c.b16 %v1606, %v1605
    %v1621 = vpack.c.b16 %v1608, %v1607
    %v1622 = vpack.c.b16 %v1610, %v1609
    %v1623 = vpack.c.b16 %v1612, %v1611
    %v1624 = vpack.c.b16 %v1614, %v1613
    %v1625 = vpack.c.b16 %v1616, %v1615
    %v1626 = vpack.c.b16 %v1618, %v1617
    %1635 = vmatprep.subr.bf16.mxu0 0
    %1636 = vmatpush1.bf16.msra.mxu0 %v1619
    %1637 = vmatprep.subr.bf16.mxu0 0
    %1638 = vmatpush1.bf16.msra.mxu0 %v1620
    %1639 = vmatprep.subr.bf16.mxu0 0
    %1640 = vmatpush1.bf16.msra.mxu0 %v1621
    %1641 = vmatprep.subr.bf16.mxu0 0
    %1642 = vmatpush1.bf16.msra.mxu0 %v1622
    %1643 = vmatprep.subr.bf16.mxu0 0
    %1644 = vmatpush1.bf16.msra.mxu0 %v1623
    %1645 = vmatprep.subr.bf16.mxu0 0
    %1646 = vmatpush1.bf16.msra.mxu0 %v1624
    %1647 = vmatprep.subr.bf16.mxu0 0
    %1648 = vmatpush1.bf16.msra.mxu0 %v1625
    %1649 = vmatprep.subr.bf16.mxu0 0
    %1650 = vmatpush1.bf16.msra.mxu0 %v1626
    %1651 = vmatprep.subr.bf16.mxu0 0
    %1652 = vmatpush1.bf16.msra.mxu0 0
    %1653 = vmatprep.subr.bf16.mxu0 0
    %1654 = vmatpush1.bf16.msra.mxu0 0
    %1655 = vmatprep.subr.bf16.mxu0 0
    %1656 = vmatpush1.bf16.msra.mxu0 0
    %1657 = vmatprep.subr.bf16.mxu0 0
    %1658 = vmatpush1.bf16.msra.mxu0 0
    %1659 = vmatprep.subr.bf16.mxu0 0
    %1660 = vmatpush1.bf16.msra.mxu0 0
    %1661 = vmatprep.subr.bf16.mxu0 0
    %1662 = vmatpush1.bf16.msra.mxu0 0
    %1663 = vmatprep.subr.bf16.mxu0 0
    %1664 = vmatpush1.bf16.msra.mxu0 0
    %1665 = vmatprep.subr.bf16.mxu0 0
    %1666 = vmatpush1.bf16.msra.mxu0 0
    %1667 = vmatprep.mubr.bf16.mxu0 0
    %1668 = vmatmul.mubr.bf16.gmra.mrb[0].mxu0 %v1579
    %v1669 = vpop.f32.mrb[0].mxu0
    %v1670 = vadd.f32 %v1585, %v1669
    %v1671 = vpop.f32.mrb[0].mxu0
    %v1672 = vpop.f32.mrb[0].mxu0
    %v1673 = vadd.f32 %v1585, %v1672
    %v1674 = vpop.f32.mrb[0].mxu0
    %1675 = vdwg.mxu0
    %v1676 = vadd.f32 %v1430, %v1670
    %v1677 = vadd.f32 %v1431, %v1673
    %v1678 = vld [vmem:[%s3 + $0x12] sm:$0x1]
    %v1679 = vld [vmem:[%s3 + $0x13] sm:$0x1]
    %1680 = vadd.xlane.f32.xlu0 %v1676
    %v1681 = vpop.xlane.xlu0 %1680
    %1682 = vadd.xlane.f32.xlu0 %v1677
    %v1683 = vpop.xlane.xlu0 %1682
    %v1684 = vmul.f32 %v1681, 0.03125
    %v1685 = vmul.f32 %v1683, 0.03125
    %v1686 = vsub.f32 %v1676, %v1684
    %v1687 = vsub.f32 %v1677, %v1685
    %v1688 = vmul.f32 %v1686, %v36
    %v1689 = vmul.f32 %v1687, %v36
    %v1690 = vmul.f32 %v1688, %v1688
    %v1691 = vmul.f32 %v1689, %v1689
    %1692 = vadd.xlane.f32.xlu0 %v1690
    %v1693 = vpop.xlane.xlu0 %1692
    %1694 = vadd.xlane.f32.xlu0 %v1691
    %v1695 = vpop.xlane.xlu0 %1694
    %v1696 = vmul.f32 %v1693, 0.03125
    %v1697 = vmul.f32 %v1695, 0.03125
    %v1698 = vadd.f32 %v1696, 1e-12
    %v1699 = vadd.f32 %v1697, 1e-12
    %v1700 = vrsqrt.pop %v1698
    %v1701 = vrsqrt.pop %v1699
    %v1702 = vmul.f32 %v1688, %v1700
    %v1703 = vmul.f32 %v1689, %v1701
    %v1705 = vlaneseq
    %v1706 = vshrl.u32 %v1705, 7
    %v1707 = vsub.s32 0, %v1706
    %v1708 = vrot.slane %v1678, %v1707
    %v1710 = vmul.f32 %v1702, %v1708
    %v1711 = vmul.f32 %v1703, %v1708
    %v1713 = vlaneseq
    %v1714 = vshrl.u32 %v1713, 7
    %v1715 = vsub.s32 0, %v1714
    %v1716 = vrot.slane %v1679, %v1715
    %v1718 = vadd.f32 %v1710, %v1716
    %v1719 = vadd.f32 %v1711, %v1716
    %v1720 = vld [vmem:[#allocation2 + $0x30] sm:$0xf]
    %v1721 = vld [vmem:[#allocation2 + $0x68] sm:$0xf]
    %v1722 = vld [vmem:[#allocation2 + $0xa0] sm:$0xf]
    %v1723 = vld [vmem:[#allocation2 + $0xd8] sm:$0xf]
    %v1724 = vld [vmem:[#allocation2 + $0x110] sm:$0xf]
    %v1725 = vld [vmem:[#allocation2 + $0x148] sm:$0xf]
    %v1726 = vld [vmem:[#allocation2 + $0x180] sm:$0xf]
    %v1727 = vld [vmem:[#allocation2 + $0x1b8] sm:$0xf]
    %v1728 = vld [vmem:[#allocation2 + $0x1f0] sm:$0xf]
    %v1729 = vld [vmem:[#allocation2 + $0x228] sm:$0xf]
    %v1730 = vld [vmem:[#allocation2 + $0x260] sm:$0xf]
    %v1731 = vld [vmem:[#allocation2 + $0x298] sm:$0xf]
    %v1732 = vld [vmem:[#allocation2 + $0x2d0] sm:$0xf]
    %v1733 = vld [vmem:[#allocation2 + $0x308] sm:$0xf]
    %v1734 = vld [vmem:[#allocation2 + $0x340] sm:$0xf]
    %v1735 = vld [vmem:[#allocation2 + $0x378] sm:$0xf]
    %v1736 = vpack.c.bf16 %v1719, %v1718
    %v1737 = vld [vmem:[%s3 + $0x16] sm:$0x1]
    %v1739 = vlaneseq
    %v1740 = vshrl.u32 %v1739, 7
    %v1741 = vsub.s32 0, %v1740
    %v1742 = vrot.slane %v1737, %v1741
    %v1760 = vunpack.c.l.b16 %v1720
    %v1761 = vunpack.c.l.b16 %v1721
    %v1762 = vunpack.c.l.b16 %v1722
    %v1763 = vunpack.c.l.b16 %v1723
    %v1764 = vunpack.c.l.b16 %v1724
    %v1765 = vunpack.c.l.b16 %v1725
    %v1766 = vunpack.c.l.b16 %v1726
    %v1767 = vunpack.c.l.b16 %v1727
    %v1768 = vunpack.c.l.b16 %v1728
    %v1769 = vunpack.c.l.b16 %v1729
    %v1770 = vunpack.c.l.b16 %v1730
    %v1771 = vunpack.c.l.b16 %v1731
    %v1772 = vunpack.c.l.b16 %v1732
    %v1773 = vunpack.c.l.b16 %v1733
    %v1774 = vunpack.c.l.b16 %v1734
    %v1775 = vunpack.c.l.b16 %v1735
    %v1776 = vpack.c.b16 %v1761, %v1760
    %v1777 = vpack.c.b16 %v1763, %v1762
    %v1778 = vpack.c.b16 %v1765, %v1764
    %v1779 = vpack.c.b16 %v1767, %v1766
    %v1780 = vpack.c.b16 %v1769, %v1768
    %v1781 = vpack.c.b16 %v1771, %v1770
    %v1782 = vpack.c.b16 %v1773, %v1772
    %v1783 = vpack.c.b16 %v1775, %v1774
    %1792 = vmatprep.subr.bf16.mxu0 0
    %1793 = vmatpush1.bf16.msra.mxu0 %v1776
    %1794 = vmatprep.subr.bf16.mxu0 0
    %1795 = vmatpush1.bf16.msra.mxu0 %v1777
    %1796 = vmatprep.subr.bf16.mxu0 0
    %1797 = vmatpush1.bf16.msra.mxu0 %v1778
    %1798 = vmatprep.subr.bf16.mxu0 0
    %1799 = vmatpush1.bf16.msra.mxu0 %v1779
    %1800 = vmatprep.subr.bf16.mxu0 0
    %1801 = vmatpush1.bf16.msra.mxu0 %v1780
    %1802 = vmatprep.subr.bf16.mxu0 0
    %1803 = vmatpush1.bf16.msra.mxu0 %v1781
    %1804 = vmatprep.subr.bf16.mxu0 0
    %1805 = vmatpush1.bf16.msra.mxu0 %v1782
    %1806 = vmatprep.subr.bf16.mxu0 0
    %1807 = vmatpush1.bf16.msra.mxu0 %v1783
    %1808 = vmatprep.subr.bf16.mxu0 0
    %1809 = vmatpush1.bf16.msra.mxu0 0
    %1810 = vmatprep.subr.bf16.mxu0 0
    %1811 = vmatpush1.bf16.msra.mxu0 0
    %1812 = vmatprep.subr.bf16.mxu0 0
    %1813 = vmatpush1.bf16.msra.mxu0 0
    %1814 = vmatprep.subr.bf16.mxu0 0
    %1815 = vmatpush1.bf16.msra.mxu0 0
    %1816 = vmatprep.subr.bf16.mxu0 0
    %1817 = vmatpush1.bf16.msra.mxu0 0
    %1818 = vmatprep.subr.bf16.mxu0 0
    %1819 = vmatpush1.bf16.msra.mxu0 0
    %1820 = vmatprep.subr.bf16.mxu0 0
    %1821 = vmatpush1.bf16.msra.mxu0 0
    %1822 = vmatprep.subr.bf16.mxu0 0
    %1823 = vmatpush1.bf16.msra.mxu0 0
    %1824 = vmatprep.mubr.bf16.mxu0 0
    %1825 = vmatmul.mubr.bf16.gmra.mrb[0].mxu0 %v1736
    %v1826 = vpop.f32.mrb[0].mxu0
    %v1827 = vadd.f32 %v1742, %v1826
    %v1828 = vpop.f32.mrb[0].mxu0
    %v1829 = vpop.f32.mrb[0].mxu0
    %v1830 = vadd.f32 %v1742, %v1829
    %v1831 = vpop.f32.mrb[0].mxu0
    %1832 = vdwg.mxu0
    %v1833 = vtanh.pop %v1827
    %v1834 = vtanh.pop %v1830
    %v1835 = vld [vmem:[#allocation2 + $0x34] sm:$0xf]
    %v1836 = vld [vmem:[#allocation2 + $0x6c] sm:$0xf]
    %v1837 = vld [vmem:[#allocation2 + $0xa4] sm:$0xf]
    %v1838 = vld [vmem:[#allocation2 + $0xdc] sm:$0xf]
    %v1839 = vld [vmem:[#allocation2 + $0x114] sm:$0xf]
    %v1840 = vld [vmem:[#allocation2 + $0x14c] sm:$0xf]
    %v1841 = vld [vmem:[#allocation2 + $0x184] sm:$0xf]
    %v1842 = vld [vmem:[#allocation2 + $0x1bc] sm:$0xf]
    %v1843 = vld [vmem:[#allocation2 + $0x1f4] sm:$0xf]
    %v1844 = vld [vmem:[#allocation2 + $0x22c] sm:$0xf]
    %v1845 = vld [vmem:[#allocation2 + $0x264] sm:$0xf]
    %v1846 = vld [vmem:[#allocation2 + $0x29c] sm:$0xf]
    %v1847 = vld [vmem:[#allocation2 + $0x2d4] sm:$0xf]
    %v1848 = vld [vmem:[#allocation2 + $0x30c] sm:$0xf]
    %v1849 = vld [vmem:[#allocation2 + $0x344] sm:$0xf]
    %v1850 = vld [vmem:[#allocation2 + $0x37c] sm:$0xf]
    %v1851 = vpack.c.bf16 %v1834, %v1833
    %v1852 = vld [vmem:[%s3 + $0x17] sm:$0x1]
    %v1854 = vlaneseq
    %v1855 = vshrl.u32 %v1854, 7
    %v1856 = vsub.s32 0, %v1855
    %v1857 = vrot.slane %v1852, %v1856
    %v1875 = vunpack.c.l.b16 %v1835
    %v1876 = vunpack.c.l.b16 %v1836
    %v1877 = vunpack.c.l.b16 %v1837
    %v1878 = vunpack.c.l.b16 %v1838
    %v1879 = vunpack.c.l.b16 %v1839
    %v1880 = vunpack.c.l.b16 %v1840
    %v1881 = vunpack.c.l.b16 %v1841
    %v1882 = vunpack.c.l.b16 %v1842
    %v1883 = vunpack.c.l.b16 %v1843
    %v1884 = vunpack.c.l.b16 %v1844
    %v1885 = vunpack.c.l.b16 %v1845
    %v1886 = vunpack.c.l.b16 %v1846
    %v1887 = vunpack.c.l.b16 %v1847
    %v1888 = vunpack.c.l.b16 %v1848
    %v1889 = vunpack.c.l.b16 %v1849
    %v1890 = vunpack.c.l.b16 %v1850
    %v1891 = vpack.c.b16 %v1876, %v1875
    %v1892 = vpack.c.b16 %v1878, %v1877
    %v1893 = vpack.c.b16 %v1880, %v1879
    %v1894 = vpack.c.b16 %v1882, %v1881
    %v1895 = vpack.c.b16 %v1884, %v1883
    %v1896 = vpack.c.b16 %v1886, %v1885
    %v1897 = vpack.c.b16 %v1888, %v1887
    %v1898 = vpack.c.b16 %v1890, %v1889
    %1907 = vmatprep.subr.bf16.mxu0 0
    %1908 = vmatpush1.bf16.msra.mxu0 %v1891
    %1909 = vmatprep.subr.bf16.mxu0 0
    %1910 = vmatpush1.bf16.msra.mxu0 %v1892
    %1911 = vmatprep.subr.bf16.mxu0 0
    %1912 = vmatpush1.bf16.msra.mxu0 %v1893
    %1913 = vmatprep.subr.bf16.mxu0 0
    %1914 = vmatpush1.bf16.msra.mxu0 %v1894
    %1915 = vmatprep.subr.bf16.mxu0 0
    %1916 = vmatpush1.bf16.msra.mxu0 %v1895
    %1917 = vmatprep.subr.bf16.mxu0 0
    %1918 = vmatpush1.bf16.msra.mxu0 %v1896
    %1919 = vmatprep.subr.bf16.mxu0 0
    %1920 = vmatpush1.bf16.msra.mxu0 %v1897
    %1921 = vmatprep.subr.bf16.mxu0 0
    %1922 = vmatpush1.bf16.msra.mxu0 %v1898
    %1923 = vmatprep.subr.bf16.mxu0 0
    %1924 = vmatpush1.bf16.msra.mxu0 0
    %1925 = vmatprep.subr.bf16.mxu0 0
    %1926 = vmatpush1.bf16.msra.mxu0 0
    %1927 = vmatprep.subr.bf16.mxu0 0
    %1928 = vmatpush1.bf16.msra.mxu0 0
    %1929 = vmatprep.subr.bf16.mxu0 0
    %1930 = vmatpush1.bf16.msra.mxu0 0
    %1931 = vmatprep.subr.bf16.mxu0 0
    %1932 = vmatpush1.bf16.msra.mxu0 0
    %1933 = vmatprep.subr.bf16.mxu0 0
    %1934 = vmatpush1.bf16.msra.mxu0 0
    %1935 = vmatprep.subr.bf16.mxu0 0
    %1936 = vmatpush1.bf16.msra.mxu0 0
    %1937 = vmatprep.subr.bf16.mxu0 0
    %1938 = vmatpush1.bf16.msra.mxu0 0
    %1939 = vmatprep.mubr.bf16.mxu0 0
    %1940 = vmatmul.mubr.bf16.gmra.mrb[0].mxu0 %v1851
    %v1941 = vpop.f32.mrb[0].mxu0
    %v1942 = vadd.f32 %v1857, %v1941
    %v1943 = vpop.f32.mrb[0].mxu0
    %v1944 = vpop.f32.mrb[0].mxu0
    %v1945 = vadd.f32 %v1857, %v1944
    %v1946 = vpop.f32.mrb[0].mxu0
    %1947 = vdwg.mxu0
    %v1948 = vmax.f32 %v1942, 0.0
    %v1949 = vmax.f32 %v1945, 0.0
    %1950 = vst [vmem:[%s4] sm:$0xff] %v1948
    %1951 = vst [vmem:[%s4 + $0x8] sm:$0xff] %v1949
    // Predicated region
    $region22: #{text_model_forward.1} parent=1 // pred_check
      _
    $region23: #{text_model_forward.1} parent=1 // pred_check_branch
      %1953 = sbr.rel (0) target = $region25
    $region24: #{text_model_forward.1} parent=1 // pred_region
      _
    $region25: #{text_model_forward.1} parent=1 // pred_fallthru
      _
    // Predicated region
    $region26: #{text_model_forward.1} parent=1 // pred_check
      _
    $region27: #{text_model_forward.1} parent=1 // pred_check_branch
      %1955 = sbr.rel (0) target = $region29
    $region28: #{text_model_forward.1} parent=1 // pred_region
      _
    $region29: #{text_model_forward.1} parent=1 // pred_fallthru
      _
    %1956 = vsyncpa [#allocation3], 1

</llo_original>
